<compile_context>
chip_gen: v7x
topology: tpu7x:2x2x1
jax: 0.10.0
libtpu: 0.0.40
codegen_flags: <defaults>
</compile_context>

<pallas_src>
import jax
import jax.numpy as jnp
from jax import lax
from jax.experimental import pallas as pl
from jax.experimental.pallas import tpu as pltpu


def lstm_kernel(x_ref, wih_ref, whh_ref, b_ref, wlin_ref, blin_ref,
                out_ref, xproj_ref):
    S, B = x_ref.shape
    Hp, G = whh_ref.shape          # Hp = padded hidden (128), G = 4 * Hp
    GP = G // 4                    # per-gate lane block (== Hp, multiple of 128)

    # ---- Prologue (off the sequential chain): input projection + bias for all
    # steps, staged in VMEM scratch.  F == 1, so this is a lane-broadcast mul.
    x_all = x_ref[...]                                        # (S, B)
    xproj_ref[...] = (b_ref[...][None, :, :]                  # (1, 1, G)
                      + x_all[:, :, None] * wih_ref[...][None, :, :])

    h0 = jnp.zeros((B, Hp), jnp.float32)
    c0 = jnp.zeros((B, Hp), jnp.float32)

    def step(t, carry):
        h, c = carry
        # (B, Hp) @ (Hp, G) on the MXU; the xproj add is the only VPU op on the
        # dependent path before the fused nonlinearity.
        gates = xproj_ref[t] + jnp.dot(h, whh_ref[...],
                                       preferred_element_type=jnp.float32)
        # Single EUP pass over the whole (B, 4*Hp) block.  i/f/o gate columns of
        # W/b were pre-scaled by 0.5 in the wrapper, so here
        #   sigmoid(z) == 0.5 * tanh(0.5 * z) + 0.5 == 0.5 * t + 0.5.
        t_all = jnp.tanh(gates)
        i_g = t_all[:, 0 * GP:1 * GP] * 0.5 + 0.5
        f_g = t_all[:, 1 * GP:2 * GP] * 0.5 + 0.5
        g_g = t_all[:, 2 * GP:3 * GP]
        o_g = t_all[:, 3 * GP:4 * GP] * 0.5 + 0.5
        c = f_g * c + i_g * g_g
        h = o_g * jnp.tanh(c)
        return h, c

    # Visible loop, fully unrolled (S is small and static).
    h, c = lax.fori_loop(0, S, step, (h0, c0), unroll=True)

    # Final Linear head on the last hidden state: predictions[-1].
    out_ref[...] = (jnp.dot(h, wlin_ref[...], preferred_element_type=jnp.float32)
                    + blin_ref[...]).astype(out_ref.dtype)


def _gate_pad_cols(w, H, Hp):
    """(rows, 4H) -> (rows, 4*Hp): gate k's H columns placed at lanes
    [k*Hp, k*Hp + H), zero elsewhere (128-lane-aligned gate blocks)."""
    pad = Hp - H
    parts = [jnp.pad(w[:, k * H:(k + 1) * H], ((0, 0), (0, pad)))
             for k in range(4)]
    return jnp.concatenate(parts, axis=1)


def lstm_forward(inputs, params):
    """inputs: (batch, seq, features) float32.  Returns (batch, output_size)."""
    B, S, F = inputs.shape
    assert F == 1, "module spec fixes input_size=1"
    four_h, H = params["w_hh"].shape          # PyTorch layout: (4H, H)
    assert four_h == 4 * H
    O = params["w_lin"].shape[0]              # PyTorch layout: (O, H)

    LANES = 128
    Hp = ((H + LANES - 1) // LANES) * LANES   # hidden padded to lane multiple
    G = 4 * Hp

    # torch: inputs.view(seq, batch, features) == row-major reinterpretation.
    # F == 1, so drop the degenerate feature axis entirely: x is (S, B).
    x = jnp.reshape(inputs.astype(jnp.float32), (S, B))

    # Pre-transposed, gate-lane-aligned, zero-padded parameters.
    wih_p = _gate_pad_cols(params["w_ih"].T.astype(jnp.float32), H, Hp)   # (1, G)
    whh_p = _gate_pad_cols(params["w_hh"].T.astype(jnp.float32), H, Hp)   # (H, G)
    whh_p = jnp.pad(whh_p, ((0, Hp - H), (0, 0)))                         # (Hp, G)
    b_sum = (params["b_ih"] + params["b_hh"]).reshape(1, 4 * H)
    b_p = _gate_pad_cols(b_sum.astype(jnp.float32), H, Hp)                # (1, G)

    # Pre-scale the i/f/o gate columns by 0.5 so the kernel can fuse all four
    # gate nonlinearities into a single tanh (sigmoid(z) = 0.5*tanh(0.5z)+0.5).
    gate_scale = jnp.concatenate(
        [jnp.full((1, Hp), 0.5, jnp.float32),   # i
         jnp.full((1, Hp), 0.5, jnp.float32),   # f
         jnp.ones((1, Hp), jnp.float32),        # g (plain tanh)
         jnp.full((1, Hp), 0.5, jnp.float32)],  # o
        axis=1)
    wih_p = wih_p * gate_scale
    whh_p = whh_p * gate_scale
    b_p = b_p * gate_scale

    wlin_p = jnp.pad(params["w_lin"].T.astype(jnp.float32),
                     ((0, Hp - H), (0, 0)))                               # (Hp, O)
    blin = params["b_lin"].reshape(1, O).astype(jnp.float32)              # (1, O)

    vmem = pl.BlockSpec(memory_space=pltpu.MemorySpace.VMEM)
    return pl.pallas_call(
        lstm_kernel,
        out_shape=jax.ShapeDtypeStruct((B, O), jnp.float32),
        in_specs=[vmem] * 6,
        out_specs=vmem,
        scratch_shapes=[pltpu.VMEM((S, B, G), jnp.float32)],
    )(x, wih_p, whh_p, b_p, wlin_p, blin)


def make_params(key, input_size=1, hidden=30, output=1):
    """Deterministic synthetic params in the PyTorch nn.LSTM/nn.Linear layout."""
    k = jax.random.split(key, 6)
    bound = 1.0 / (hidden ** 0.5)
    u = lambda kk, shape: jax.random.uniform(kk, shape, jnp.float32, -bound, bound)
    return {
        "w_ih": u(k[0], (4 * hidden, input_size)),   # (4H, F)
        "w_hh": u(k[1], (4 * hidden, hidden)),       # (4H, H)
        "b_ih": u(k[2], (4 * hidden,)),
        "b_hh": u(k[3], (4 * hidden,)),
        "w_lin": u(k[4], (output, hidden)),          # (O, H)
        "b_lin": u(k[5], (output,)),
    }


def lstm_reference(inputs, params):
    """Pure-JAX reference of the PyTorch forward, for verification."""
    B, S, F = inputs.shape
    H = params["w_hh"].shape[1]
    x = jnp.reshape(inputs, (S, B, F))
    h = jnp.zeros((B, H), jnp.float32)
    c = jnp.zeros((B, H), jnp.float32)
    w_ih_t = params["w_ih"].T
    w_hh_t = params["w_hh"].T
    b = params["b_ih"] + params["b_hh"]
    for t in range(S):
        gates = x[t] @ w_ih_t + h @ w_hh_t + b
        i_g = jax.nn.sigmoid(gates[:, 0:H])
        f_g = jax.nn.sigmoid(gates[:, H:2 * H])
        g_g = jnp.tanh(gates[:, 2 * H:3 * H])
        o_g = jax.nn.sigmoid(gates[:, 3 * H:4 * H])
        c = f_g * c + i_g * g_g
        h = o_g * jnp.tanh(c)
    return h @ params["w_lin"].T + params["b_lin"]


if __name__ == "__main__":
    # B=8 fills the vreg sublanes / MXU LHS rows (per perf review) and is still small.
    batch, seq, feat, hidden, out_sz = 8, 8, 1, 30, 1
    key = jax.random.PRNGKey(0)
    k_in, k_p = jax.random.split(key)
    inputs = jax.random.normal(k_in, (batch, seq, feat), jnp.float32)
    params = make_params(k_p, feat, hidden, out_sz)

    result = jax.block_until_ready(lstm_forward(inputs, params))
    ref = lstm_reference(inputs, params)

    assert result.shape == (batch, out_sz)
    assert jnp.allclose(result, ref, atol=1e-5, rtol=1e-5), (result, ref)
    print("KERNEL_OK")
</pallas_src>

<mosaic_0001>
module attributes {stable_mosaic.version = 11 : i64} {
  func.func @lstm_kernel(%arg0: memref<8x8xf32, #tpu.memory_space<vmem>>, %arg1: memref<1x512xf32, #tpu.memory_space<vmem>>, %arg2: memref<128x512xf32, #tpu.memory_space<vmem>>, %arg3: memref<1x512xf32, #tpu.memory_space<vmem>>, %arg4: memref<128x1xf32, #tpu.memory_space<vmem>>, %arg5: memref<1x1xf32, #tpu.memory_space<vmem>>, %arg6: memref<8x1xf32, #tpu.memory_space<vmem>>, %arg7: memref<8x8x512xf32, #tpu.memory_space<vmem>>) attributes {dimension_semantics = [], scalar_prefetch = 0 : i64, scratch_operands = 1 : i64, tpu.core_type = #tpu.core_type<tc>} {
    %c0 = arith.constant 0 : index
    %c0_0 = arith.constant 0 : index
    %0 = vector.load %arg0[%c0, %c0_0] : memref<8x8xf32, #tpu.memory_space<vmem>>, vector<8x8xf32>
    %c0_1 = arith.constant 0 : index
    %c0_2 = arith.constant 0 : index
    %1 = vector.load %arg3[%c0_1, %c0_2] : memref<1x512xf32, #tpu.memory_space<vmem>>, vector<1x512xf32>
    %2 = vector.shape_cast %1 : vector<1x512xf32> to vector<1x1x512xf32>
    %3 = vector.shape_cast %0 : vector<8x8xf32> to vector<8x8x1xf32>
    %c0_3 = arith.constant 0 : index
    %c0_4 = arith.constant 0 : index
    %4 = vector.load %arg1[%c0_3, %c0_4] : memref<1x512xf32, #tpu.memory_space<vmem>>, vector<1x512xf32>
    %5 = vector.shape_cast %4 : vector<1x512xf32> to vector<1x1x512xf32>
    %6 = vector.broadcast %3 : vector<8x8x1xf32> to vector<8x8x512xf32>
    %7 = vector.broadcast %5 : vector<1x1x512xf32> to vector<8x8x512xf32>
    %8 = arith.mulf %6, %7 : vector<8x8x512xf32>
    %9 = vector.broadcast %2 : vector<1x1x512xf32> to vector<8x8x512xf32>
    %10 = arith.addf %9, %8 : vector<8x8x512xf32>
    %c0_5 = arith.constant 0 : index
    %c0_6 = arith.constant 0 : index
    %c0_7 = arith.constant 0 : index
    %11 = vector.load %arg7[%c0_5, %c0_6, %c0_7] : memref<8x8x512xf32, #tpu.memory_space<vmem>>, vector<8x8x512xf32>
    tpu.vector_store %arg7[%c0_5, %c0_6, %c0_7], %10 {strides = array<i32>} : memref<8x8x512xf32, #tpu.memory_space<vmem>>, vector<8x8x512xf32>,
    %cst = arith.constant 0.000000e+00 : f32
    %12 = vector.broadcast %cst : f32 to vector<8x128xf32>
    %cst_8 = arith.constant 0.000000e+00 : f32
    %13 = vector.broadcast %cst_8 : f32 to vector<8x128xf32>
    %c0_i32 = arith.constant 0 : i32
    %14 = arith.index_cast %c0_i32 : i32 to index
    %c0_9 = arith.constant 0 : index
    %c0_10 = arith.constant 0 : index
    %15 = vector.load %arg7[%14, %c0_9, %c0_10] : memref<8x8x512xf32, #tpu.memory_space<vmem>>, vector<1x8x512xf32>
    %16 = vector.shape_cast %15 : vector<1x8x512xf32> to vector<8x512xf32>
    %c0_11 = arith.constant 0 : index
    %c0_12 = arith.constant 0 : index
    %17 = vector.load %arg2[%c0_11, %c0_12] : memref<128x512xf32, #tpu.memory_space<vmem>>, vector<128x512xf32>
    %cst_13 = arith.constant dense<0.000000e+00> : vector<8x512xf32>
    %18 = tpu.matmul %12, %17, %cst_13 {dimension_numbers = #tpu.dot_dimension_numbers<[1], [0], [0], [1], [0, 0, 1, 1], [], []>} : vector<8x128xf32>, vector<128x512xf32>, vector<8x512xf32> -> vector<8x512xf32>
    %19 = arith.addf %16, %18 : vector<8x512xf32>
    %20 = math.tanh %19 : vector<8x512xf32>
    %21 = vector.extract_strided_slice %20 {offsets = [0, 0], sizes = [8, 128], strides = [1, 1]} : vector<8x512xf32> to vector<8x128xf32>
    %cst_14 = arith.constant 5.000000e-01 : f32
    %22 = vector.broadcast %cst_14 : f32 to vector<8x128xf32>
    %23 = arith.mulf %21, %22 : vector<8x128xf32>
    %cst_15 = arith.constant 5.000000e-01 : f32
    %24 = vector.broadcast %cst_15 : f32 to vector<8x128xf32>
    %25 = arith.addf %23, %24 : vector<8x128xf32>
    %26 = vector.extract_strided_slice %20 {offsets = [0, 128], sizes = [8, 128], strides = [1, 1]} : vector<8x512xf32> to vector<8x128xf32>
    %cst_16 = arith.constant 5.000000e-01 : f32
    %27 = vector.broadcast %cst_16 : f32 to vector<8x128xf32>
    %28 = arith.mulf %26, %27 : vector<8x128xf32>
    %cst_17 = arith.constant 5.000000e-01 : f32
    %29 = vector.broadcast %cst_17 : f32 to vector<8x128xf32>
    %30 = arith.addf %28, %29 : vector<8x128xf32>
    %31 = vector.extract_strided_slice %20 {offsets = [0, 256], sizes = [8, 128], strides = [1, 1]} : vector<8x512xf32> to vector<8x128xf32>
    %32 = vector.extract_strided_slice %20 {offsets = [0, 384], sizes = [8, 128], strides = [1, 1]} : vector<8x512xf32> to vector<8x128xf32>
    %cst_18 = arith.constant 5.000000e-01 : f32
    %33 = vector.broadcast %cst_18 : f32 to vector<8x128xf32>
    %34 = arith.mulf %32, %33 : vector<8x128xf32>
    %cst_19 = arith.constant 5.000000e-01 : f32
    %35 = vector.broadcast %cst_19 : f32 to vector<8x128xf32>
    %36 = arith.addf %34, %35 : vector<8x128xf32>
    %37 = arith.mulf %30, %13 : vector<8x128xf32>
    %38 = arith.mulf %25, %31 : vector<8x128xf32>
    %39 = arith.addf %37, %38 : vector<8x128xf32>
    %40 = math.tanh %39 : vector<8x128xf32>
    %41 = arith.mulf %36, %40 : vector<8x128xf32>
    %c1_i32 = arith.constant 1 : i32
    %42 = arith.index_cast %c1_i32 : i32 to index
    %c0_20 = arith.constant 0 : index
    %c0_21 = arith.constant 0 : index
    %43 = vector.load %arg7[%42, %c0_20, %c0_21] : memref<8x8x512xf32, #tpu.memory_space<vmem>>, vector<1x8x512xf32>
    %44 = vector.shape_cast %43 : vector<1x8x512xf32> to vector<8x512xf32>
    %c0_22 = arith.constant 0 : index
    %c0_23 = arith.constant 0 : index
    %45 = vector.load %arg2[%c0_22, %c0_23] : memref<128x512xf32, #tpu.memory_space<vmem>>, vector<128x512xf32>
    %cst_24 = arith.constant dense<0.000000e+00> : vector<8x512xf32>
    %46 = tpu.matmul %41, %45, %cst_24 {dimension_numbers = #tpu.dot_dimension_numbers<[1], [0], [0], [1], [0, 0, 1, 1], [], []>} : vector<8x128xf32>, vector<128x512xf32>, vector<8x512xf32> -> vector<8x512xf32>
    %47 = arith.addf %44, %46 : vector<8x512xf32>
    %48 = math.tanh %47 : vector<8x512xf32>
    %49 = vector.extract_strided_slice %48 {offsets = [0, 0], sizes = [8, 128], strides = [1, 1]} : vector<8x512xf32> to vector<8x128xf32>
    %cst_25 = arith.constant 5.000000e-01 : f32
    %50 = vector.broadcast %cst_25 : f32 to vector<8x128xf32>
    %51 = arith.mulf %49, %50 : vector<8x128xf32>
    %cst_26 = arith.constant 5.000000e-01 : f32
    %52 = vector.broadcast %cst_26 : f32 to vector<8x128xf32>
    %53 = arith.addf %51, %52 : vector<8x128xf32>
    %54 = vector.extract_strided_slice %48 {offsets = [0, 128], sizes = [8, 128], strides = [1, 1]} : vector<8x512xf32> to vector<8x128xf32>
    %cst_27 = arith.constant 5.000000e-01 : f32
    %55 = vector.broadcast %cst_27 : f32 to vector<8x128xf32>
    %56 = arith.mulf %54, %55 : vector<8x128xf32>
    %cst_28 = arith.constant 5.000000e-01 : f32
    %57 = vector.broadcast %cst_28 : f32 to vector<8x128xf32>
    %58 = arith.addf %56, %57 : vector<8x128xf32>
    %59 = vector.extract_strided_slice %48 {offsets = [0, 256], sizes = [8, 128], strides = [1, 1]} : vector<8x512xf32> to vector<8x128xf32>
    %60 = vector.extract_strided_slice %48 {offsets = [0, 384], sizes = [8, 128], strides = [1, 1]} : vector<8x512xf32> to vector<8x128xf32>
    %cst_29 = arith.constant 5.000000e-01 : f32
    %61 = vector.broadcast %cst_29 : f32 to vector<8x128xf32>
    %62 = arith.mulf %60, %61 : vector<8x128xf32>
    %cst_30 = arith.constant 5.000000e-01 : f32
    %63 = vector.broadcast %cst_30 : f32 to vector<8x128xf32>
    %64 = arith.addf %62, %63 : vector<8x128xf32>
    %65 = arith.mulf %58, %39 : vector<8x128xf32>
    %66 = arith.mulf %53, %59 : vector<8x128xf32>
    %67 = arith.addf %65, %66 : vector<8x128xf32>
    %68 = math.tanh %67 : vector<8x128xf32>
    %69 = arith.mulf %64, %68 : vector<8x128xf32>
    %c2_i32 = arith.constant 2 : i32
    %70 = arith.index_cast %c2_i32 : i32 to index
    %c0_31 = arith.constant 0 : index
    %c0_32 = arith.constant 0 : index
    %71 = vector.load %arg7[%70, %c0_31, %c0_32] : memref<8x8x512xf32, #tpu.memory_space<vmem>>, vector<1x8x512xf32>
    %72 = vector.shape_cast %71 : vector<1x8x512xf32> to vector<8x512xf32>
    %c0_33 = arith.constant 0 : index
    %c0_34 = arith.constant 0 : index
    %73 = vector.load %arg2[%c0_33, %c0_34] : memref<128x512xf32, #tpu.memory_space<vmem>>, vector<128x512xf32>
    %cst_35 = arith.constant dense<0.000000e+00> : vector<8x512xf32>
    %74 = tpu.matmul %69, %73, %cst_35 {dimension_numbers = #tpu.dot_dimension_numbers<[1], [0], [0], [1], [0, 0, 1, 1], [], []>} : vector<8x128xf32>, vector<128x512xf32>, vector<8x512xf32> -> vector<8x512xf32>
    %75 = arith.addf %72, %74 : vector<8x512xf32>
    %76 = math.tanh %75 : vector<8x512xf32>
    %77 = vector.extract_strided_slice %76 {offsets = [0, 0], sizes = [8, 128], strides = [1, 1]} : vector<8x512xf32> to vector<8x128xf32>
    %cst_36 = arith.constant 5.000000e-01 : f32
    %78 = vector.broadcast %cst_36 : f32 to vector<8x128xf32>
    %79 = arith.mulf %77, %78 : vector<8x128xf32>
    %cst_37 = arith.constant 5.000000e-01 : f32
    %80 = vector.broadcast %cst_37 : f32 to vector<8x128xf32>
    %81 = arith.addf %79, %80 : vector<8x128xf32>
    %82 = vector.extract_strided_slice %76 {offsets = [0, 128], sizes = [8, 128], strides = [1, 1]} : vector<8x512xf32> to vector<8x128xf32>
    %cst_38 = arith.constant 5.000000e-01 : f32
    %83 = vector.broadcast %cst_38 : f32 to vector<8x128xf32>
    %84 = arith.mulf %82, %83 : vector<8x128xf32>
    %cst_39 = arith.constant 5.000000e-01 : f32
    %85 = vector.broadcast %cst_39 : f32 to vector<8x128xf32>
    %86 = arith.addf %84, %85 : vector<8x128xf32>
    %87 = vector.extract_strided_slice %76 {offsets = [0, 256], sizes = [8, 128], strides = [1, 1]} : vector<8x512xf32> to vector<8x128xf32>
    %88 = vector.extract_strided_slice %76 {offsets = [0, 384], sizes = [8, 128], strides = [1, 1]} : vector<8x512xf32> to vector<8x128xf32>
    %cst_40 = arith.constant 5.000000e-01 : f32
    %89 = vector.broadcast %cst_40 : f32 to vector<8x128xf32>
    %90 = arith.mulf %88, %89 : vector<8x128xf32>
    %cst_41 = arith.constant 5.000000e-01 : f32
    %91 = vector.broadcast %cst_41 : f32 to vector<8x128xf32>
    %92 = arith.addf %90, %91 : vector<8x128xf32>
    %93 = arith.mulf %86, %67 : vector<8x128xf32>
    %94 = arith.mulf %81, %87 : vector<8x128xf32>
    %95 = arith.addf %93, %94 : vector<8x128xf32>
    %96 = math.tanh %95 : vector<8x128xf32>
    %97 = arith.mulf %92, %96 : vector<8x128xf32>
    %c3_i32 = arith.constant 3 : i32
    %98 = arith.index_cast %c3_i32 : i32 to index
    %c0_42 = arith.constant 0 : index
    %c0_43 = arith.constant 0 : index
    %99 = vector.load %arg7[%98, %c0_42, %c0_43] : memref<8x8x512xf32, #tpu.memory_space<vmem>>, vector<1x8x512xf32>
    %100 = vector.shape_cast %99 : vector<1x8x512xf32> to vector<8x512xf32>
    %c0_44 = arith.constant 0 : index
    %c0_45 = arith.constant 0 : index
    %101 = vector.load %arg2[%c0_44, %c0_45] : memref<128x512xf32, #tpu.memory_space<vmem>>, vector<128x512xf32>
    %cst_46 = arith.constant dense<0.000000e+00> : vector<8x512xf32>
    %102 = tpu.matmul %97, %101, %cst_46 {dimension_numbers = #tpu.dot_dimension_numbers<[1], [0], [0], [1], [0, 0, 1, 1], [], []>} : vector<8x128xf32>, vector<128x512xf32>, vector<8x512xf32> -> vector<8x512xf32>
    %103 = arith.addf %100, %102 : vector<8x512xf32>
    %104 = math.tanh %103 : vector<8x512xf32>
    %105 = vector.extract_strided_slice %104 {offsets = [0, 0], sizes = [8, 128], strides = [1, 1]} : vector<8x512xf32> to vector<8x128xf32>
    %cst_47 = arith.constant 5.000000e-01 : f32
    %106 = vector.broadcast %cst_47 : f32 to vector<8x128xf32>
    %107 = arith.mulf %105, %106 : vector<8x128xf32>
    %cst_48 = arith.constant 5.000000e-01 : f32
    %108 = vector.broadcast %cst_48 : f32 to vector<8x128xf32>
    %109 = arith.addf %107, %108 : vector<8x128xf32>
    %110 = vector.extract_strided_slice %104 {offsets = [0, 128], sizes = [8, 128], strides = [1, 1]} : vector<8x512xf32> to vector<8x128xf32>
    %cst_49 = arith.constant 5.000000e-01 : f32
    %111 = vector.broadcast %cst_49 : f32 to vector<8x128xf32>
    %112 = arith.mulf %110, %111 : vector<8x128xf32>
    %cst_50 = arith.constant 5.000000e-01 : f32
    %113 = vector.broadcast %cst_50 : f32 to vector<8x128xf32>
    %114 = arith.addf %112, %113 : vector<8x128xf32>
    %115 = vector.extract_strided_slice %104 {offsets = [0, 256], sizes = [8, 128], strides = [1, 1]} : vector<8x512xf32> to vector<8x128xf32>
    %116 = vector.extract_strided_slice %104 {offsets = [0, 384], sizes = [8, 128], strides = [1, 1]} : vector<8x512xf32> to vector<8x128xf32>
    %cst_51 = arith.constant 5.000000e-01 : f32
    %117 = vector.broadcast %cst_51 : f32 to vector<8x128xf32>
    %118 = arith.mulf %116, %117 : vector<8x128xf32>
    %cst_52 = arith.constant 5.000000e-01 : f32
    %119 = vector.broadcast %cst_52 : f32 to vector<8x128xf32>
    %120 = arith.addf %118, %119 : vector<8x128xf32>
    %121 = arith.mulf %114, %95 : vector<8x128xf32>
    %122 = arith.mulf %109, %115 : vector<8x128xf32>
    %123 = arith.addf %121, %122 : vector<8x128xf32>
    %124 = math.tanh %123 : vector<8x128xf32>
    %125 = arith.mulf %120, %124 : vector<8x128xf32>
    %c4_i32 = arith.constant 4 : i32
    %126 = arith.index_cast %c4_i32 : i32 to index
    %c0_53 = arith.constant 0 : index
    %c0_54 = arith.constant 0 : index
    %127 = vector.load %arg7[%126, %c0_53, %c0_54] : memref<8x8x512xf32, #tpu.memory_space<vmem>>, vector<1x8x512xf32>
    %128 = vector.shape_cast %127 : vector<1x8x512xf32> to vector<8x512xf32>
    %c0_55 = arith.constant 0 : index
    %c0_56 = arith.constant 0 : index
    %129 = vector.load %arg2[%c0_55, %c0_56] : memref<128x512xf32, #tpu.memory_space<vmem>>, vector<128x512xf32>
    %cst_57 = arith.constant dense<0.000000e+00> : vector<8x512xf32>
    %130 = tpu.matmul %125, %129, %cst_57 {dimension_numbers = #tpu.dot_dimension_numbers<[1], [0], [0], [1], [0, 0, 1, 1], [], []>} : vector<8x128xf32>, vector<128x512xf32>, vector<8x512xf32> -> vector<8x512xf32>
    %131 = arith.addf %128, %130 : vector<8x512xf32>
    %132 = math.tanh %131 : vector<8x512xf32>
    %133 = vector.extract_strided_slice %132 {offsets = [0, 0], sizes = [8, 128], strides = [1, 1]} : vector<8x512xf32> to vector<8x128xf32>
    %cst_58 = arith.constant 5.000000e-01 : f32
    %134 = vector.broadcast %cst_58 : f32 to vector<8x128xf32>
    %135 = arith.mulf %133, %134 : vector<8x128xf32>
    %cst_59 = arith.constant 5.000000e-01 : f32
    %136 = vector.broadcast %cst_59 : f32 to vector<8x128xf32>
    %137 = arith.addf %135, %136 : vector<8x128xf32>
    %138 = vector.extract_strided_slice %132 {offsets = [0, 128], sizes = [8, 128], strides = [1, 1]} : vector<8x512xf32> to vector<8x128xf32>
    %cst_60 = arith.constant 5.000000e-01 : f32
    %139 = vector.broadcast %cst_60 : f32 to vector<8x128xf32>
    %140 = arith.mulf %138, %139 : vector<8x128xf32>
    %cst_61 = arith.constant 5.000000e-01 : f32
    %141 = vector.broadcast %cst_61 : f32 to vector<8x128xf32>
    %142 = arith.addf %140, %141 : vector<8x128xf32>
    %143 = vector.extract_strided_slice %132 {offsets = [0, 256], sizes = [8, 128], strides = [1, 1]} : vector<8x512xf32> to vector<8x128xf32>
    %144 = vector.extract_strided_slice %132 {offsets = [0, 384], sizes = [8, 128], strides = [1, 1]} : vector<8x512xf32> to vector<8x128xf32>
    %cst_62 = arith.constant 5.000000e-01 : f32
    %145 = vector.broadcast %cst_62 : f32 to vector<8x128xf32>
    %146 = arith.mulf %144, %145 : vector<8x128xf32>
    %cst_63 = arith.constant 5.000000e-01 : f32
    %147 = vector.broadcast %cst_63 : f32 to vector<8x128xf32>
    %148 = arith.addf %146, %147 : vector<8x128xf32>
    %149 = arith.mulf %142, %123 : vector<8x128xf32>
    %150 = arith.mulf %137, %143 : vector<8x128xf32>
    %151 = arith.addf %149, %150 : vector<8x128xf32>
    %152 = math.tanh %151 : vector<8x128xf32>
    %153 = arith.mulf %148, %152 : vector<8x128xf32>
    %c5_i32 = arith.constant 5 : i32
    %154 = arith.index_cast %c5_i32 : i32 to index
    %c0_64 = arith.constant 0 : index
    %c0_65 = arith.constant 0 : index
    %155 = vector.load %arg7[%154, %c0_64, %c0_65] : memref<8x8x512xf32, #tpu.memory_space<vmem>>, vector<1x8x512xf32>
    %156 = vector.shape_cast %155 : vector<1x8x512xf32> to vector<8x512xf32>
    %c0_66 = arith.constant 0 : index
    %c0_67 = arith.constant 0 : index
    %157 = vector.load %arg2[%c0_66, %c0_67] : memref<128x512xf32, #tpu.memory_space<vmem>>, vector<128x512xf32>
    %cst_68 = arith.constant dense<0.000000e+00> : vector<8x512xf32>
    %158 = tpu.matmul %153, %157, %cst_68 {dimension_numbers = #tpu.dot_dimension_numbers<[1], [0], [0], [1], [0, 0, 1, 1], [], []>} : vector<8x128xf32>, vector<128x512xf32>, vector<8x512xf32> -> vector<8x512xf32>
    %159 = arith.addf %156, %158 : vector<8x512xf32>
    %160 = math.tanh %159 : vector<8x512xf32>
    %161 = vector.extract_strided_slice %160 {offsets = [0, 0], sizes = [8, 128], strides = [1, 1]} : vector<8x512xf32> to vector<8x128xf32>
    %cst_69 = arith.constant 5.000000e-01 : f32
    %162 = vector.broadcast %cst_69 : f32 to vector<8x128xf32>
    %163 = arith.mulf %161, %162 : vector<8x128xf32>
    %cst_70 = arith.constant 5.000000e-01 : f32
    %164 = vector.broadcast %cst_70 : f32 to vector<8x128xf32>
    %165 = arith.addf %163, %164 : vector<8x128xf32>
    %166 = vector.extract_strided_slice %160 {offsets = [0, 128], sizes = [8, 128], strides = [1, 1]} : vector<8x512xf32> to vector<8x128xf32>
    %cst_71 = arith.constant 5.000000e-01 : f32
    %167 = vector.broadcast %cst_71 : f32 to vector<8x128xf32>
    %168 = arith.mulf %166, %167 : vector<8x128xf32>
    %cst_72 = arith.constant 5.000000e-01 : f32
    %169 = vector.broadcast %cst_72 : f32 to vector<8x128xf32>
    %170 = arith.addf %168, %169 : vector<8x128xf32>
    %171 = vector.extract_strided_slice %160 {offsets = [0, 256], sizes = [8, 128], strides = [1, 1]} : vector<8x512xf32> to vector<8x128xf32>
    %172 = vector.extract_strided_slice %160 {offsets = [0, 384], sizes = [8, 128], strides = [1, 1]} : vector<8x512xf32> to vector<8x128xf32>
    %cst_73 = arith.constant 5.000000e-01 : f32
    %173 = vector.broadcast %cst_73 : f32 to vector<8x128xf32>
    %174 = arith.mulf %172, %173 : vector<8x128xf32>
    %cst_74 = arith.constant 5.000000e-01 : f32
    %175 = vector.broadcast %cst_74 : f32 to vector<8x128xf32>
    %176 = arith.addf %174, %175 : vector<8x128xf32>
    %177 = arith.mulf %170, %151 : vector<8x128xf32>
    %178 = arith.mulf %165, %171 : vector<8x128xf32>
    %179 = arith.addf %177, %178 : vector<8x128xf32>
    %180 = math.tanh %179 : vector<8x128xf32>
    %181 = arith.mulf %176, %180 : vector<8x128xf32>
    %c6_i32 = arith.constant 6 : i32
    %182 = arith.index_cast %c6_i32 : i32 to index
    %c0_75 = arith.constant 0 : index
    %c0_76 = arith.constant 0 : index
    %183 = vector.load %arg7[%182, %c0_75, %c0_76] : memref<8x8x512xf32, #tpu.memory_space<vmem>>, vector<1x8x512xf32>
    %184 = vector.shape_cast %183 : vector<1x8x512xf32> to vector<8x512xf32>
    %c0_77 = arith.constant 0 : index
    %c0_78 = arith.constant 0 : index
    %185 = vector.load %arg2[%c0_77, %c0_78] : memref<128x512xf32, #tpu.memory_space<vmem>>, vector<128x512xf32>
    %cst_79 = arith.constant dense<0.000000e+00> : vector<8x512xf32>
    %186 = tpu.matmul %181, %185, %cst_79 {dimension_numbers = #tpu.dot_dimension_numbers<[1], [0], [0], [1], [0, 0, 1, 1], [], []>} : vector<8x128xf32>, vector<128x512xf32>, vector<8x512xf32> -> vector<8x512xf32>
    %187 = arith.addf %184, %186 : vector<8x512xf32>
    %188 = math.tanh %187 : vector<8x512xf32>
    %189 = vector.extract_strided_slice %188 {offsets = [0, 0], sizes = [8, 128], strides = [1, 1]} : vector<8x512xf32> to vector<8x128xf32>
    %cst_80 = arith.constant 5.000000e-01 : f32
    %190 = vector.broadcast %cst_80 : f32 to vector<8x128xf32>
    %191 = arith.mulf %189, %190 : vector<8x128xf32>
    %cst_81 = arith.constant 5.000000e-01 : f32
    %192 = vector.broadcast %cst_81 : f32 to vector<8x128xf32>
    %193 = arith.addf %191, %192 : vector<8x128xf32>
    %194 = vector.extract_strided_slice %188 {offsets = [0, 128], sizes = [8, 128], strides = [1, 1]} : vector<8x512xf32> to vector<8x128xf32>
    %cst_82 = arith.constant 5.000000e-01 : f32
    %195 = vector.broadcast %cst_82 : f32 to vector<8x128xf32>
    %196 = arith.mulf %194, %195 : vector<8x128xf32>
    %cst_83 = arith.constant 5.000000e-01 : f32
    %197 = vector.broadcast %cst_83 : f32 to vector<8x128xf32>
    %198 = arith.addf %196, %197 : vector<8x128xf32>
    %199 = vector.extract_strided_slice %188 {offsets = [0, 256], sizes = [8, 128], strides = [1, 1]} : vector<8x512xf32> to vector<8x128xf32>
    %200 = vector.extract_strided_slice %188 {offsets = [0, 384], sizes = [8, 128], strides = [1, 1]} : vector<8x512xf32> to vector<8x128xf32>
    %cst_84 = arith.constant 5.000000e-01 : f32
    %201 = vector.broadcast %cst_84 : f32 to vector<8x128xf32>
    %202 = arith.mulf %200, %201 : vector<8x128xf32>
    %cst_85 = arith.constant 5.000000e-01 : f32
    %203 = vector.broadcast %cst_85 : f32 to vector<8x128xf32>
    %204 = arith.addf %202, %203 : vector<8x128xf32>
    %205 = arith.mulf %198, %179 : vector<8x128xf32>
    %206 = arith.mulf %193, %199 : vector<8x128xf32>
    %207 = arith.addf %205, %206 : vector<8x128xf32>
    %208 = math.tanh %207 : vector<8x128xf32>
    %209 = arith.mulf %204, %208 : vector<8x128xf32>
    %c7_i32 = arith.constant 7 : i32
    %210 = arith.index_cast %c7_i32 : i32 to index
    %c0_86 = arith.constant 0 : index
    %c0_87 = arith.constant 0 : index
    %211 = vector.load %arg7[%210, %c0_86, %c0_87] : memref<8x8x512xf32, #tpu.memory_space<vmem>>, vector<1x8x512xf32>
    %212 = vector.shape_cast %211 : vector<1x8x512xf32> to vector<8x512xf32>
    %c0_88 = arith.constant 0 : index
    %c0_89 = arith.constant 0 : index
    %213 = vector.load %arg2[%c0_88, %c0_89] : memref<128x512xf32, #tpu.memory_space<vmem>>, vector<128x512xf32>
    %cst_90 = arith.constant dense<0.000000e+00> : vector<8x512xf32>
    %214 = tpu.matmul %209, %213, %cst_90 {dimension_numbers = #tpu.dot_dimension_numbers<[1], [0], [0], [1], [0, 0, 1, 1], [], []>} : vector<8x128xf32>, vector<128x512xf32>, vector<8x512xf32> -> vector<8x512xf32>
    %215 = arith.addf %212, %214 : vector<8x512xf32>
    %216 = math.tanh %215 : vector<8x512xf32>
    %217 = vector.extract_strided_slice %216 {offsets = [0, 0], sizes = [8, 128], strides = [1, 1]} : vector<8x512xf32> to vector<8x128xf32>
    %cst_91 = arith.constant 5.000000e-01 : f32
    %218 = vector.broadcast %cst_91 : f32 to vector<8x128xf32>
    %219 = arith.mulf %217, %218 : vector<8x128xf32>
    %cst_92 = arith.constant 5.000000e-01 : f32
    %220 = vector.broadcast %cst_92 : f32 to vector<8x128xf32>
    %221 = arith.addf %219, %220 : vector<8x128xf32>
    %222 = vector.extract_strided_slice %216 {offsets = [0, 128], sizes = [8, 128], strides = [1, 1]} : vector<8x512xf32> to vector<8x128xf32>
    %cst_93 = arith.constant 5.000000e-01 : f32
    %223 = vector.broadcast %cst_93 : f32 to vector<8x128xf32>
    %224 = arith.mulf %222, %223 : vector<8x128xf32>
    %cst_94 = arith.constant 5.000000e-01 : f32
    %225 = vector.broadcast %cst_94 : f32 to vector<8x128xf32>
    %226 = arith.addf %224, %225 : vector<8x128xf32>
    %227 = vector.extract_strided_slice %216 {offsets = [0, 256], sizes = [8, 128], strides = [1, 1]} : vector<8x512xf32> to vector<8x128xf32>
    %228 = vector.extract_strided_slice %216 {offsets = [0, 384], sizes = [8, 128], strides = [1, 1]} : vector<8x512xf32> to vector<8x128xf32>
    %cst_95 = arith.constant 5.000000e-01 : f32
    %229 = vector.broadcast %cst_95 : f32 to vector<8x128xf32>
    %230 = arith.mulf %228, %229 : vector<8x128xf32>
    %cst_96 = arith.constant 5.000000e-01 : f32
    %231 = vector.broadcast %cst_96 : f32 to vector<8x128xf32>
    %232 = arith.addf %230, %231 : vector<8x128xf32>
    %233 = arith.mulf %226, %207 : vector<8x128xf32>
    %234 = arith.mulf %221, %227 : vector<8x128xf32>
    %235 = arith.addf %233, %234 : vector<8x128xf32>
    %236 = math.tanh %235 : vector<8x128xf32>
    %237 = arith.mulf %232, %236 : vector<8x128xf32>
    %c8_i32 = arith.constant 8 : i32
    %c0_97 = arith.constant 0 : index
    %c0_98 = arith.constant 0 : index
    %238 = vector.load %arg4[%c0_97, %c0_98] : memref<128x1xf32, #tpu.memory_space<vmem>>, vector<128x1xf32>
    %cst_99 = arith.constant dense<0.000000e+00> : vector<8x1xf32>
    %239 = tpu.matmul %237, %238, %cst_99 {dimension_numbers = #tpu.dot_dimension_numbers<[1], [0], [0], [1], [0, 0, 1, 1], [], []>} : vector<8x128xf32>, vector<128x1xf32>, vector<8x1xf32> -> vector<8x1xf32>
    %c0_100 = arith.constant 0 : index
    %c0_101 = arith.constant 0 : index
    %240 = vector.load %arg5[%c0_100, %c0_101] : memref<1x1xf32, #tpu.memory_space<vmem>>, vector<1x1xf32>
    %241 = vector.broadcast %240 : vector<1x1xf32> to vector<8x1xf32>
    %242 = arith.addf %239, %241 : vector<8x1xf32>
    %c0_102 = arith.constant 0 : index
    %c0_103 = arith.constant 0 : index
    %243 = vector.load %arg6[%c0_102, %c0_103] : memref<8x1xf32, #tpu.memory_space<vmem>>, vector<8x1xf32>
    tpu.vector_store %arg6[%c0_102, %c0_103], %242 {strides = array<i32>} : memref<8x1xf32, #tpu.memory_space<vmem>>, vector<8x1xf32>,
    return
  }
}

</mosaic_0001>

<llo_original>
// kernel: tpu_custom_call.1
$region0: #{tpu_custom_call.1}
  #allocation0 [shape = 'u32[]', space=smem, size = 0x4, offset = 0x4, fixed_abs, tag = 'smem constant byte address 0x4 - core index']
  #allocation1 [shape = 'u32[144,128]{1,0:T(1,128)}', space=vmem, size = 0x12000, scoped, tag = 'internal scratch']
  #allocation2 [shape = 'f32[8,8,512]{2,1,0:T(8,128)}', space=vmem, size = 0x20000, scoped, tag = 'scratch operand']
  #allocation3 [shape = 'f32[1,1]{1,0:T(1,128)S(1)}', space=vmem, size = 0x200, scoped, tag = 'scoped memory for tpu_custom_call.1']
  %s0 = inlined_call_operand.vmem [shape: f32[8,8], index: 0, kind: input, shape index: {}]
  %s1 = inlined_call_operand.vmem [shape: f32[1,512], index: 1, kind: input, shape index: {}]
  %s2 = inlined_call_operand.hbm [shape: f32[128,512], index: 2, kind: input, shape index: {}]
  %s3 = inlined_call_operand.vmem [shape: f32[1,512], index: 3, kind: input, shape index: {}]
  %s4 = inlined_call_operand.vmem [shape: f32[128,1], index: 4, kind: input, shape index: {}]
  %s5 = inlined_call_operand.<no memory space> [shape: f32[1,1], index: 5, kind: input, shape index: {}]
  %s6 = inlined_call_operand.vmem [shape: f32[8,1], index: 6, kind: output, shape index: {}]
  %s7 = sld [smem:[#allocation0]]
  $region38: #{tpu_custom_call.1} parent=0
    _
  %s9 = ssub.s32 1, %s7
  %s10 = scalar_select 0, %s9, %s7
  %v11 = vstv %s5
  %12 = vst [vmem:[#allocation3] sm:$0x1] %v11
  $region1: #{tpu_custom_call.1} parent=0
    #allocation4 [shape = 'u8[262144]{0}', space=vmem, size = 0x40000, scoped, tag = 'input window, operand 2, single buffered']
    #allocation5 [shape = 's32[1]{0}', space=sflag, size = 0x4, scoped, tag = 'scoped memory for tpu_custom_call.1']
    %13 = vsyncpa [#allocation5], 0
    // Predicated region
    $region2: #{tpu_custom_call.1} parent=1 // pred_check
      _
    $region3: #{tpu_custom_call.1} parent=1 // pred_check_branch
      %15 = sbr.rel (0) target = $region5
    $region4: #{tpu_custom_call.1} parent=1 // pred_region
      _
    $region5: #{tpu_custom_call.1} parent=1 // pred_fallthru
      _
    // Predicated region
    $region6: #{tpu_custom_call.1} parent=1 // pred_check
      _
    $region7: #{tpu_custom_call.1} parent=1 // pred_check_branch
      %17 = sbr.rel (0) target = $region9
    $region8: #{tpu_custom_call.1} parent=1 // pred_region
      _
    $region9: #{tpu_custom_call.1} parent=1 // pred_fallthru
      _
    // Predicated region
    $region10: #{tpu_custom_call.1} parent=1 // pred_check
      _
    $region11: #{tpu_custom_call.1} parent=1 // pred_check_branch
      %19 = sbr.rel (0) target = $region13
    $region12: #{tpu_custom_call.1} parent=1 // pred_region
      %s21 = ssub.s32 8192, 8192
      %22 = vsyncadd [#allocation5], %s21
      %s23 = sshll.u32 [#allocation4], 4
      %s24 = int_to_ptr.vmem [resolvable:$true] %s23
      %29 = dma.hbm_to_vmem [thread:$0]  %s2, 8192, %s24, [#allocation5], 512, 512, 32
    $region13: #{tpu_custom_call.1} parent=1 // pred_fallthru
      _
    // Predicated region
    $region14: #{tpu_custom_call.1} parent=1 // pred_check
      _
    $region15: #{tpu_custom_call.1} parent=1 // pred_check_branch
      %31 = sbr.rel (0) target = $region17
    $region16: #{tpu_custom_call.1} parent=1 // pred_region
      _
    $region17: #{tpu_custom_call.1} parent=1 // pred_fallthru
      _
    // Predicated region
    $region18: #{tpu_custom_call.1} parent=1 // pred_check
      _
    $region19: #{tpu_custom_call.1} parent=1 // pred_check_branch
      %33 = sbr.rel (0) target = $region21
    $region20: #{tpu_custom_call.1} parent=1 // pred_region
      _
    $region21: #{tpu_custom_call.1} parent=1 // pred_fallthru
      _
    // Predicated region
    $region22: #{tpu_custom_call.1} parent=1 // pred_check
      _
    $region23: #{tpu_custom_call.1} parent=1 // pred_check_branch
      %35 = sbr.rel (0) target = $region25
    $region24: #{tpu_custom_call.1} parent=1 // pred_region
      _
    $region25: #{tpu_custom_call.1} parent=1 // pred_fallthru
      _
    // Predicated region
    $region26: #{tpu_custom_call.1} parent=1 // pred_check
      _
    $region27: #{tpu_custom_call.1} parent=1 // pred_check_branch
      %37 = sbr.rel (0) target = $region29
    $region28: #{tpu_custom_call.1} parent=1 // pred_region
      %38 = dma.done [#allocation5], 8192
    $region29: #{tpu_custom_call.1} parent=1 // pred_fallthru
      _
    %v39 = vld [vmem:[%s0] sm:$0xff]
    %v40 = vld [vmem:[%s3] sm:$0xf]
    %v41 = vlaneseq
    %v42 = vshrl.u32 %v41, 7
    %v43 = vsub.s32 0, %v42
    %v44 = vrot.slane %v39, %v43
    %46 = vbcast.lane.b32.xlu0 %v44, 256
    %v47 = vpop.permute.xlu0 %46
    %v48 = vlaneseq
    %v49 = vshrl.u32 %v48, 7
    %v50 = vsub.s32 1, %v49
    %v51 = vrot.slane %v39, %v50
    %53 = vbcast.lane.b32.xlu0 %v51, 256
    %v54 = vpop.permute.xlu0 %53
    %v55 = vlaneseq
    %v56 = vshrl.u32 %v55, 7
    %v57 = vsub.s32 2, %v56
    %v58 = vrot.slane %v39, %v57
    %60 = vbcast.lane.b32.xlu0 %v58, 256
    %v61 = vpop.permute.xlu0 %60
    %v62 = vlaneseq
    %v63 = vshrl.u32 %v62, 7
    %v64 = vsub.s32 3, %v63
    %v65 = vrot.slane %v39, %v64
    %67 = vbcast.lane.b32.xlu0 %v65, 256
    %v68 = vpop.permute.xlu0 %67
    %v69 = vlaneseq
    %v70 = vshrl.u32 %v69, 7
    %v71 = vsub.s32 4, %v70
    %v72 = vrot.slane %v39, %v71
    %74 = vbcast.lane.b32.xlu0 %v72, 256
    %v75 = vpop.permute.xlu0 %74
    %v76 = vlaneseq
    %v77 = vshrl.u32 %v76, 7
    %v78 = vsub.s32 5, %v77
    %v79 = vrot.slane %v39, %v78
    %81 = vbcast.lane.b32.xlu0 %v79, 256
    %v82 = vpop.permute.xlu0 %81
    %v83 = vlaneseq
    %v84 = vshrl.u32 %v83, 7
    %v85 = vsub.s32 6, %v84
    %v86 = vrot.slane %v39, %v85
    %88 = vbcast.lane.b32.xlu0 %v86, 256
    %v89 = vpop.permute.xlu0 %88
    %v90 = vlaneseq
    %v91 = vshrl.u32 %v90, 7
    %v92 = vsub.s32 7, %v91
    %v93 = vrot.slane %v39, %v92
    %95 = vbcast.lane.b32.xlu0 %v93, 256
    %v96 = vpop.permute.xlu0 %95
    %v97 = vld [vmem:[%s1] sm:$0xf]
    %v99 = vlaneseq
    %v100 = vshrl.u32 %v99, 7
    %v101 = vsub.s32 0, %v100
    %v102 = vrot.slane %v97, %v101
    %v103 = vlaneseq
    %v104 = vshrl.u32 %v103, 7
    %v105 = vsub.s32 1, %v104
    %v106 = vrot.slane %v97, %v105
    %v107 = vlaneseq
    %v108 = vshrl.u32 %v107, 7
    %v109 = vsub.s32 2, %v108
    %v110 = vrot.slane %v97, %v109
    %v111 = vlaneseq
    %v112 = vshrl.u32 %v111, 7
    %v113 = vsub.s32 3, %v112
    %v114 = vrot.slane %v97, %v113
    %v119 = vmul.f32 %v47, %v102
    %v120 = vmul.f32 %v47, %v106
    %v121 = vmul.f32 %v47, %v110
    %v122 = vmul.f32 %v47, %v114
    %v123 = vmul.f32 %v54, %v102
    %v124 = vmul.f32 %v54, %v106
    %v125 = vmul.f32 %v54, %v110
    %v126 = vmul.f32 %v54, %v114
    %v127 = vmul.f32 %v61, %v102
    %v128 = vmul.f32 %v61, %v106
    %v129 = vmul.f32 %v61, %v110
    %v130 = vmul.f32 %v61, %v114
    %v131 = vmul.f32 %v68, %v102
    %v132 = vmul.f32 %v68, %v106
    %v133 = vmul.f32 %v68, %v110
    %v134 = vmul.f32 %v68, %v114
    %v135 = vmul.f32 %v75, %v102
    %v136 = vmul.f32 %v75, %v106
    %v137 = vmul.f32 %v75, %v110
    %v138 = vmul.f32 %v75, %v114
    %v139 = vmul.f32 %v82, %v102
    %v140 = vmul.f32 %v82, %v106
    %v141 = vmul.f32 %v82, %v110
    %v142 = vmul.f32 %v82, %v114
    %v143 = vmul.f32 %v89, %v102
    %v144 = vmul.f32 %v89, %v106
    %v145 = vmul.f32 %v89, %v110
    %v146 = vmul.f32 %v89, %v114
    %v147 = vmul.f32 %v96, %v102
    %v148 = vmul.f32 %v96, %v106
    %v149 = vmul.f32 %v96, %v110
    %v150 = vmul.f32 %v96, %v114
    %v152 = vlaneseq
    %v153 = vshrl.u32 %v152, 7
    %v154 = vsub.s32 0, %v153
    %v155 = vrot.slane %v40, %v154
    %v156 = vlaneseq
    %v157 = vshrl.u32 %v156, 7
    %v158 = vsub.s32 1, %v157
    %v159 = vrot.slane %v40, %v158
    %v160 = vlaneseq
    %v161 = vshrl.u32 %v160, 7
    %v162 = vsub.s32 2, %v161
    %v163 = vrot.slane %v40, %v162
    %v164 = vlaneseq
    %v165 = vshrl.u32 %v164, 7
    %v166 = vsub.s32 3, %v165
    %v167 = vrot.slane %v40, %v166
    %v172 = vadd.f32 %v155, %v119
    %v173 = vadd.f32 %v159, %v120
    %v174 = vadd.f32 %v163, %v121
    %v175 = vadd.f32 %v167, %v122
    %v176 = vadd.f32 %v155, %v123
    %v177 = vadd.f32 %v159, %v124
    %v178 = vadd.f32 %v163, %v125
    %v179 = vadd.f32 %v167, %v126
    %v180 = vadd.f32 %v155, %v127
    %v181 = vadd.f32 %v159, %v128
    %v182 = vadd.f32 %v163, %v129
    %v183 = vadd.f32 %v167, %v130
    %v184 = vadd.f32 %v155, %v131
    %v185 = vadd.f32 %v159, %v132
    %v186 = vadd.f32 %v163, %v133
    %v187 = vadd.f32 %v167, %v134
    %v188 = vadd.f32 %v155, %v135
    %v189 = vadd.f32 %v159, %v136
    %v190 = vadd.f32 %v163, %v137
    %v191 = vadd.f32 %v167, %v138
    %v192 = vadd.f32 %v155, %v139
    %v193 = vadd.f32 %v159, %v140
    %v194 = vadd.f32 %v163, %v141
    %v195 = vadd.f32 %v167, %v142
    %v196 = vadd.f32 %v155, %v143
    %v197 = vadd.f32 %v159, %v144
    %v198 = vadd.f32 %v163, %v145
    %v199 = vadd.f32 %v167, %v146
    %v200 = vadd.f32 %v155, %v147
    %v201 = vadd.f32 %v159, %v148
    %v202 = vadd.f32 %v163, %v149
    %v203 = vadd.f32 %v167, %v150
    %204 = vst [vmem:[#allocation2] sm:$0xff] %v172
    %205 = vst [vmem:[#allocation2 + $0x8] sm:$0xff] %v173
    %206 = vst [vmem:[#allocation2 + $0x10] sm:$0xff] %v174
    %207 = vst [vmem:[#allocation2 + $0x18] sm:$0xff] %v175
    %208 = vst [vmem:[#allocation2 + $0x20] sm:$0xff] %v176
    %209 = vst [vmem:[#allocation2 + $0x28] sm:$0xff] %v177
    %210 = vst [vmem:[#allocation2 + $0x30] sm:$0xff] %v178
    %211 = vst [vmem:[#allocation2 + $0x38] sm:$0xff] %v179
    %212 = vst [vmem:[#allocation2 + $0x40] sm:$0xff] %v180
    %213 = vst [vmem:[#allocation2 + $0x48] sm:$0xff] %v181
    %214 = vst [vmem:[#allocation2 + $0x50] sm:$0xff] %v182
    %215 = vst [vmem:[#allocation2 + $0x58] sm:$0xff] %v183
    %216 = vst [vmem:[#allocation2 + $0x60] sm:$0xff] %v184
    %217 = vst [vmem:[#allocation2 + $0x68] sm:$0xff] %v185
    %218 = vst [vmem:[#allocation2 + $0x70] sm:$0xff] %v186
    %219 = vst [vmem:[#allocation2 + $0x78] sm:$0xff] %v187
    %220 = vst [vmem:[#allocation2 + $0x80] sm:$0xff] %v188
    %221 = vst [vmem:[#allocation2 + $0x88] sm:$0xff] %v189
    %222 = vst [vmem:[#allocation2 + $0x90] sm:$0xff] %v190
    %223 = vst [vmem:[#allocation2 + $0x98] sm:$0xff] %v191
    %224 = vst [vmem:[#allocation2 + $0xa0] sm:$0xff] %v192
    %225 = vst [vmem:[#allocation2 + $0xa8] sm:$0xff] %v193
    %226 = vst [vmem:[#allocation2 + $0xb0] sm:$0xff] %v194
    %227 = vst [vmem:[#allocation2 + $0xb8] sm:$0xff] %v195
    %228 = vst [vmem:[#allocation2 + $0xc0] sm:$0xff] %v196
    %229 = vst [vmem:[#allocation2 + $0xc8] sm:$0xff] %v197
    %230 = vst [vmem:[#allocation2 + $0xd0] sm:$0xff] %v198
    %231 = vst [vmem:[#allocation2 + $0xd8] sm:$0xff] %v199
    %232 = vst [vmem:[#allocation2 + $0xe0] sm:$0xff] %v200
    %233 = vst [vmem:[#allocation2 + $0xe8] sm:$0xff] %v201
    %234 = vst [vmem:[#allocation2 + $0xf0] sm:$0xff] %v202
    %235 = vst [vmem:[#allocation2 + $0xf8] sm:$0xff] %v203
    %v236 = vld [vmem:[#allocation2] sm:$0xff]
    %v237 = vld [vmem:[#allocation2 + $0x8] sm:$0xff]
    %v238 = vld [vmem:[#allocation2 + $0x10] sm:$0xff]
    %v239 = vld [vmem:[#allocation2 + $0x18] sm:$0xff]
    %v240 = vld [vmem:[#allocation4] sm:$0xff]
    %v241 = vld [vmem:[#allocation4 + $0x8] sm:$0xff]
    %v242 = vld [vmem:[#allocation4 + $0x10] sm:$0xff]
    %v243 = vld [vmem:[#allocation4 + $0x18] sm:$0xff]
    %v244 = vld [vmem:[#allocation4 + $0x20] sm:$0xff]
    %v245 = vld [vmem:[#allocation4 + $0x28] sm:$0xff]
    %v246 = vld [vmem:[#allocation4 + $0x30] sm:$0xff]
    %v247 = vld [vmem:[#allocation4 + $0x38] sm:$0xff]
    %v248 = vld [vmem:[#allocation4 + $0x40] sm:$0xff]
    %v249 = vld [vmem:[#allocation4 + $0x48] sm:$0xff]
    %v250 = vld [vmem:[#allocation4 + $0x50] sm:$0xff]
    %v251 = vld [vmem:[#allocation4 + $0x58] sm:$0xff]
    %v252 = vld [vmem:[#allocation4 + $0x60] sm:$0xff]
    %v253 = vld [vmem:[#allocation4 + $0x68] sm:$0xff]
    %v254 = vld [vmem:[#allocation4 + $0x70] sm:$0xff]
    %v255 = vld [vmem:[#allocation4 + $0x78] sm:$0xff]
    %v256 = vld [vmem:[#allocation4 + $0x80] sm:$0xff]
    %v257 = vld [vmem:[#allocation4 + $0x88] sm:$0xff]
    %v258 = vld [vmem:[#allocation4 + $0x90] sm:$0xff]
    %v259 = vld [vmem:[#allocation4 + $0x98] sm:$0xff]
    %v260 = vld [vmem:[#allocation4 + $0xa0] sm:$0xff]
    %v261 = vld [vmem:[#allocation4 + $0xa8] sm:$0xff]
    %v262 = vld [vmem:[#allocation4 + $0xb0] sm:$0xff]
    %v263 = vld [vmem:[#allocation4 + $0xb8] sm:$0xff]
    %v264 = vld [vmem:[#allocation4 + $0xc0] sm:$0xff]
    %v265 = vld [vmem:[#allocation4 + $0xc8] sm:$0xff]
    %v266 = vld [vmem:[#allocation4 + $0xd0] sm:$0xff]
    %v267 = vld [vmem:[#allocation4 + $0xd8] sm:$0xff]
    %v268 = vld [vmem:[#allocation4 + $0xe0] sm:$0xff]
    %v269 = vld [vmem:[#allocation4 + $0xe8] sm:$0xff]
    %v270 = vld [vmem:[#allocation4 + $0xf0] sm:$0xff]
    %v271 = vld [vmem:[#allocation4 + $0xf8] sm:$0xff]
    %v272 = vld [vmem:[#allocation4 + $0x100] sm:$0xff]
    %v273 = vld [vmem:[#allocation4 + $0x108] sm:$0xff]
    %v274 = vld [vmem:[#allocation4 + $0x110] sm:$0xff]
    %v275 = vld [vmem:[#allocation4 + $0x118] sm:$0xff]
    %v276 = vld [vmem:[#allocation4 + $0x120] sm:$0xff]
    %v277 = vld [vmem:[#allocation4 + $0x128] sm:$0xff]
    %v278 = vld [vmem:[#allocation4 + $0x130] sm:$0xff]
    %v279 = vld [vmem:[#allocation4 + $0x138] sm:$0xff]
    %v280 = vld [vmem:[#allocation4 + $0x140] sm:$0xff]
    %v281 = vld [vmem:[#allocation4 + $0x148] sm:$0xff]
    %v282 = vld [vmem:[#allocation4 + $0x150] sm:$0xff]
    %v283 = vld [vmem:[#allocation4 + $0x158] sm:$0xff]
    %v284 = vld [vmem:[#allocation4 + $0x160] sm:$0xff]
    %v285 = vld [vmem:[#allocation4 + $0x168] sm:$0xff]
    %v286 = vld [vmem:[#allocation4 + $0x170] sm:$0xff]
    %v287 = vld [vmem:[#allocation4 + $0x178] sm:$0xff]
    %v288 = vld [vmem:[#allocation4 + $0x180] sm:$0xff]
    %v289 = vld [vmem:[#allocation4 + $0x188] sm:$0xff]
    %v290 = vld [vmem:[#allocation4 + $0x190] sm:$0xff]
    %v291 = vld [vmem:[#allocation4 + $0x198] sm:$0xff]
    %v292 = vld [vmem:[#allocation4 + $0x1a0] sm:$0xff]
    %v293 = vld [vmem:[#allocation4 + $0x1a8] sm:$0xff]
    %v294 = vld [vmem:[#allocation4 + $0x1b0] sm:$0xff]
    %v295 = vld [vmem:[#allocation4 + $0x1b8] sm:$0xff]
    %v296 = vld [vmem:[#allocation4 + $0x1c0] sm:$0xff]
    %v297 = vld [vmem:[#allocation4 + $0x1c8] sm:$0xff]
    %v298 = vld [vmem:[#allocation4 + $0x1d0] sm:$0xff]
    %v299 = vld [vmem:[#allocation4 + $0x1d8] sm:$0xff]
    %v300 = vld [vmem:[#allocation4 + $0x1e0] sm:$0xff]
    %v301 = vld [vmem:[#allocation4 + $0x1e8] sm:$0xff]
    %v302 = vld [vmem:[#allocation4 + $0x1f0] sm:$0xff]
    %v303 = vld [vmem:[#allocation4 + $0x1f8] sm:$0xff]
    %304 = vmatprep.subr.mxu0 %v241
    %305 = vmatpush1.msra.mxu0 %v240
    %306 = vmatprep.subr.mxu0 %v245
    %307 = vmatpush1.msra.mxu0 %v244
    %308 = vmatprep.subr.mxu0 %v249
    %309 = vmatpush1.msra.mxu0 %v248
    %310 = vmatprep.subr.mxu0 %v253
    %311 = vmatpush1.msra.mxu0 %v252
    %312 = vmatprep.subr.mxu0 %v257
    %313 = vmatpush1.msra.mxu0 %v256
    %314 = vmatprep.subr.mxu0 %v261
    %315 = vmatpush1.msra.mxu0 %v260
    %316 = vmatprep.subr.mxu0 %v265
    %317 = vmatpush1.msra.mxu0 %v264
    %318 = vmatprep.subr.mxu0 %v269
    %319 = vmatpush1.msra.mxu0 %v268
    %320 = vmatprep.subr.mxu0 %v273
    %321 = vmatpush1.msra.mxu0 %v272
    %322 = vmatprep.subr.mxu0 %v277
    %323 = vmatpush1.msra.mxu0 %v276
    %324 = vmatprep.subr.mxu0 %v281
    %325 = vmatpush1.msra.mxu0 %v280
    %326 = vmatprep.subr.mxu0 %v285
    %327 = vmatpush1.msra.mxu0 %v284
    %328 = vmatprep.subr.mxu0 %v289
    %329 = vmatpush1.msra.mxu0 %v288
    %330 = vmatprep.subr.mxu0 %v293
    %331 = vmatpush1.msra.mxu0 %v292
    %332 = vmatprep.subr.mxu0 %v297
    %333 = vmatpush1.msra.mxu0 %v296
    %334 = vmatprep.subr.mxu0 %v301
    %335 = vmatpush1.msra.mxu0 %v300
    %336 = vmatprep.subr.mxu0 0.0
    %337 = vmatpush1.msra.mxu0 0.0
    %338 = vmatprep.subr.mxu0 0.0
    %339 = vmatpush1.msra.mxu0 0.0
    %340 = vmatprep.subr.mxu0 0.0
    %341 = vmatpush1.msra.mxu0 0.0
    %342 = vmatprep.subr.mxu0 0.0
    %343 = vmatpush1.msra.mxu0 0.0
    %344 = vmatprep.subr.mxu0 0.0
    %345 = vmatpush1.msra.mxu0 0.0
    %346 = vmatprep.subr.mxu0 0.0
    %347 = vmatpush1.msra.mxu0 0.0
    %348 = vmatprep.subr.mxu0 0.0
    %349 = vmatpush1.msra.mxu0 0.0
    %350 = vmatprep.subr.mxu0 0.0
    %351 = vmatpush1.msra.mxu0 0.0
    %352 = vmatprep.subr.mxu0 0.0
    %353 = vmatpush1.msra.mxu0 0.0
    %354 = vmatprep.subr.mxu0 0.0
    %355 = vmatpush1.msra.mxu0 0.0
    %356 = vmatprep.subr.mxu0 0.0
    %357 = vmatpush1.msra.mxu0 0.0
    %358 = vmatprep.subr.mxu0 0.0
    %359 = vmatpush1.msra.mxu0 0.0
    %360 = vmatprep.subr.mxu0 0.0
    %361 = vmatpush1.msra.mxu0 0.0
    %362 = vmatprep.subr.mxu0 0.0
    %363 = vmatpush1.msra.mxu0 0.0
    %364 = vmatprep.subr.mxu0 0.0
    %365 = vmatpush1.msra.mxu0 0.0
    %366 = vmatprep.subr.mxu0 0.0
    %367 = vmatpush1.msra.mxu0 0.0
    %368 = vmatprep.mubr.f32.mxu0 0.0
    %369 = vmatmul.mubr.f32.gmra.mrb[0].mxu0 0.0
    %v370 = vpop.f32.mrb[0].mxu0
    %v371 = vadd.f32 0.0, %v370
    %v372 = vpop.f32.mrb[0].mxu0
    %v373 = vadd.f32 0.0, %v372
    %374 = vdwg.mxu0
    %375 = vmatprep.subr.mxu0 %v243
    %376 = vmatpush1.msra.mxu0 %v242
    %377 = vmatprep.subr.mxu0 %v247
    %378 = vmatpush1.msra.mxu0 %v246
    %379 = vmatprep.subr.mxu0 %v251
    %380 = vmatpush1.msra.mxu0 %v250
    %381 = vmatprep.subr.mxu0 %v255
    %382 = vmatpush1.msra.mxu0 %v254
    %383 = vmatprep.subr.mxu0 %v259
    %384 = vmatpush1.msra.mxu0 %v258
    %385 = vmatprep.subr.mxu0 %v263
    %386 = vmatpush1.msra.mxu0 %v262
    %387 = vmatprep.subr.mxu0 %v267
    %388 = vmatpush1.msra.mxu0 %v266
    %389 = vmatprep.subr.mxu0 %v271
    %390 = vmatpush1.msra.mxu0 %v270
    %391 = vmatprep.subr.mxu0 %v275
    %392 = vmatpush1.msra.mxu0 %v274
    %393 = vmatprep.subr.mxu0 %v279
    %394 = vmatpush1.msra.mxu0 %v278
    %395 = vmatprep.subr.mxu0 %v283
    %396 = vmatpush1.msra.mxu0 %v282
    %397 = vmatprep.subr.mxu0 %v287
    %398 = vmatpush1.msra.mxu0 %v286
    %399 = vmatprep.subr.mxu0 %v291
    %400 = vmatpush1.msra.mxu0 %v290
    %401 = vmatprep.subr.mxu0 %v295
    %402 = vmatpush1.msra.mxu0 %v294
    %403 = vmatprep.subr.mxu0 %v299
    %404 = vmatpush1.msra.mxu0 %v298
    %405 = vmatprep.subr.mxu0 %v303
    %406 = vmatpush1.msra.mxu0 %v302
    %407 = vmatprep.subr.mxu0 0.0
    %408 = vmatpush1.msra.mxu0 0.0
    %409 = vmatprep.subr.mxu0 0.0
    %410 = vmatpush1.msra.mxu0 0.0
    %411 = vmatprep.subr.mxu0 0.0
    %412 = vmatpush1.msra.mxu0 0.0
    %413 = vmatprep.subr.mxu0 0.0
    %414 = vmatpush1.msra.mxu0 0.0
    %415 = vmatprep.subr.mxu0 0.0
    %416 = vmatpush1.msra.mxu0 0.0
    %417 = vmatprep.subr.mxu0 0.0
    %418 = vmatpush1.msra.mxu0 0.0
    %419 = vmatprep.subr.mxu0 0.0
    %420 = vmatpush1.msra.mxu0 0.0
    %421 = vmatprep.subr.mxu0 0.0
    %422 = vmatpush1.msra.mxu0 0.0
    %423 = vmatprep.subr.mxu0 0.0
    %424 = vmatpush1.msra.mxu0 0.0
    %425 = vmatprep.subr.mxu0 0.0
    %426 = vmatpush1.msra.mxu0 0.0
    %427 = vmatprep.subr.mxu0 0.0
    %428 = vmatpush1.msra.mxu0 0.0
    %429 = vmatprep.subr.mxu0 0.0
    %430 = vmatpush1.msra.mxu0 0.0
    %431 = vmatprep.subr.mxu0 0.0
    %432 = vmatpush1.msra.mxu0 0.0
    %433 = vmatprep.subr.mxu0 0.0
    %434 = vmatpush1.msra.mxu0 0.0
    %435 = vmatprep.subr.mxu0 0.0
    %436 = vmatpush1.msra.mxu0 0.0
    %437 = vmatprep.subr.mxu0 0.0
    %438 = vmatpush1.msra.mxu0 0.0
    %439 = vmatprep.mubr.f32.mxu0 0.0
    %440 = vmatmul.mubr.f32.gmra.mrb[0].mxu0 0.0
    %v441 = vpop.f32.mrb[0].mxu0
    %v442 = vadd.f32 0.0, %v441
    %v443 = vpop.f32.mrb[0].mxu0
    %v444 = vadd.f32 0.0, %v443
    %445 = vdwg.mxu0
    %v446 = vadd.f32 %v236, %v371
    %v447 = vadd.f32 %v237, %v373
    %v448 = vadd.f32 %v238, %v442
    %v449 = vadd.f32 %v239, %v444
    %v450 = vtanh.pop %v446
    %v451 = vtanh.pop %v447
    %v452 = vtanh.pop %v448
    %v453 = vtanh.pop %v449
    %v454 = vmul.f32 %v450, 0.5
    %v455 = vadd.f32 %v454, 0.5
    %v456 = vmul.f32 %v451, 0.5
    %v457 = vadd.f32 %v456, 0.5
    %v458 = vmul.f32 %v453, 0.5
    %v459 = vadd.f32 %v458, 0.5
    %v460 = vmul.f32 %v457, 0.0
    %v461 = vmul.f32 %v455, %v452
    %v462 = vadd.f32 %v460, %v461
    %v463 = vtanh.pop %v462
    %v464 = vmul.f32 %v459, %v463
    %s465 = scalar_lea.vmem [#allocation2], 32
    %v466 = vld [vmem:[%s465] sm:$0xff]
    %v467 = vld [vmem:[%s465 + $0x8] sm:$0xff]
    %v468 = vld [vmem:[%s465 + $0x10] sm:$0xff]
    %v469 = vld [vmem:[%s465 + $0x18] sm:$0xff]
    %470 = vmatprep.subr.mxu0 %v241
    %471 = vmatpush1.msra.mxu0 %v240
    %472 = vmatprep.subr.mxu0 %v245
    %473 = vmatpush1.msra.mxu0 %v244
    %474 = vmatprep.subr.mxu0 %v249
    %475 = vmatpush1.msra.mxu0 %v248
    %476 = vmatprep.subr.mxu0 %v253
    %477 = vmatpush1.msra.mxu0 %v252
    %478 = vmatprep.subr.mxu0 %v257
    %479 = vmatpush1.msra.mxu0 %v256
    %480 = vmatprep.subr.mxu0 %v261
    %481 = vmatpush1.msra.mxu0 %v260
    %482 = vmatprep.subr.mxu0 %v265
    %483 = vmatpush1.msra.mxu0 %v264
    %484 = vmatprep.subr.mxu0 %v269
    %485 = vmatpush1.msra.mxu0 %v268
    %486 = vmatprep.subr.mxu0 %v273
    %487 = vmatpush1.msra.mxu0 %v272
    %488 = vmatprep.subr.mxu0 %v277
    %489 = vmatpush1.msra.mxu0 %v276
    %490 = vmatprep.subr.mxu0 %v281
    %491 = vmatpush1.msra.mxu0 %v280
    %492 = vmatprep.subr.mxu0 %v285
    %493 = vmatpush1.msra.mxu0 %v284
    %494 = vmatprep.subr.mxu0 %v289
    %495 = vmatpush1.msra.mxu0 %v288
    %496 = vmatprep.subr.mxu0 %v293
    %497 = vmatpush1.msra.mxu0 %v292
    %498 = vmatprep.subr.mxu0 %v297
    %499 = vmatpush1.msra.mxu0 %v296
    %500 = vmatprep.subr.mxu0 %v301
    %501 = vmatpush1.msra.mxu0 %v300
    %502 = vmatprep.subr.mxu0 0.0
    %503 = vmatpush1.msra.mxu0 0.0
    %504 = vmatprep.subr.mxu0 0.0
    %505 = vmatpush1.msra.mxu0 0.0
    %506 = vmatprep.subr.mxu0 0.0
    %507 = vmatpush1.msra.mxu0 0.0
    %508 = vmatprep.subr.mxu0 0.0
    %509 = vmatpush1.msra.mxu0 0.0
    %510 = vmatprep.subr.mxu0 0.0
    %511 = vmatpush1.msra.mxu0 0.0
    %512 = vmatprep.subr.mxu0 0.0
    %513 = vmatpush1.msra.mxu0 0.0
    %514 = vmatprep.subr.mxu0 0.0
    %515 = vmatpush1.msra.mxu0 0.0
    %516 = vmatprep.subr.mxu0 0.0
    %517 = vmatpush1.msra.mxu0 0.0
    %518 = vmatprep.subr.mxu0 0.0
    %519 = vmatpush1.msra.mxu0 0.0
    %520 = vmatprep.subr.mxu0 0.0
    %521 = vmatpush1.msra.mxu0 0.0
    %522 = vmatprep.subr.mxu0 0.0
    %523 = vmatpush1.msra.mxu0 0.0
    %524 = vmatprep.subr.mxu0 0.0
    %525 = vmatpush1.msra.mxu0 0.0
    %526 = vmatprep.subr.mxu0 0.0
    %527 = vmatpush1.msra.mxu0 0.0
    %528 = vmatprep.subr.mxu0 0.0
    %529 = vmatpush1.msra.mxu0 0.0
    %530 = vmatprep.subr.mxu0 0.0
    %531 = vmatpush1.msra.mxu0 0.0
    %532 = vmatprep.subr.mxu0 0.0
    %533 = vmatpush1.msra.mxu0 0.0
    %534 = vmatprep.mubr.f32.mxu0 0.0
    %535 = vmatmul.mubr.f32.gmra.mrb[0].mxu0 %v464
    %v536 = vpop.f32.mrb[0].mxu0
    %v537 = vadd.f32 0.0, %v536
    %v538 = vpop.f32.mrb[0].mxu0
    %v539 = vadd.f32 0.0, %v538
    %540 = vdwg.mxu0
    %541 = vmatprep.subr.mxu0 %v243
    %542 = vmatpush1.msra.mxu0 %v242
    %543 = vmatprep.subr.mxu0 %v247
    %544 = vmatpush1.msra.mxu0 %v246
    %545 = vmatprep.subr.mxu0 %v251
    %546 = vmatpush1.msra.mxu0 %v250
    %547 = vmatprep.subr.mxu0 %v255
    %548 = vmatpush1.msra.mxu0 %v254
    %549 = vmatprep.subr.mxu0 %v259
    %550 = vmatpush1.msra.mxu0 %v258
    %551 = vmatprep.subr.mxu0 %v263
    %552 = vmatpush1.msra.mxu0 %v262
    %553 = vmatprep.subr.mxu0 %v267
    %554 = vmatpush1.msra.mxu0 %v266
    %555 = vmatprep.subr.mxu0 %v271
    %556 = vmatpush1.msra.mxu0 %v270
    %557 = vmatprep.subr.mxu0 %v275
    %558 = vmatpush1.msra.mxu0 %v274
    %559 = vmatprep.subr.mxu0 %v279
    %560 = vmatpush1.msra.mxu0 %v278
    %561 = vmatprep.subr.mxu0 %v283
    %562 = vmatpush1.msra.mxu0 %v282
    %563 = vmatprep.subr.mxu0 %v287
    %564 = vmatpush1.msra.mxu0 %v286
    %565 = vmatprep.subr.mxu0 %v291
    %566 = vmatpush1.msra.mxu0 %v290
    %567 = vmatprep.subr.mxu0 %v295
    %568 = vmatpush1.msra.mxu0 %v294
    %569 = vmatprep.subr.mxu0 %v299
    %570 = vmatpush1.msra.mxu0 %v298
    %571 = vmatprep.subr.mxu0 %v303
    %572 = vmatpush1.msra.mxu0 %v302
    %573 = vmatprep.subr.mxu0 0.0
    %574 = vmatpush1.msra.mxu0 0.0
    %575 = vmatprep.subr.mxu0 0.0
    %576 = vmatpush1.msra.mxu0 0.0
    %577 = vmatprep.subr.mxu0 0.0
    %578 = vmatpush1.msra.mxu0 0.0
    %579 = vmatprep.subr.mxu0 0.0
    %580 = vmatpush1.msra.mxu0 0.0
    %581 = vmatprep.subr.mxu0 0.0
    %582 = vmatpush1.msra.mxu0 0.0
    %583 = vmatprep.subr.mxu0 0.0
    %584 = vmatpush1.msra.mxu0 0.0
    %585 = vmatprep.subr.mxu0 0.0
    %586 = vmatpush1.msra.mxu0 0.0
    %587 = vmatprep.subr.mxu0 0.0
    %588 = vmatpush1.msra.mxu0 0.0
    %589 = vmatprep.subr.mxu0 0.0
    %590 = vmatpush1.msra.mxu0 0.0
    %591 = vmatprep.subr.mxu0 0.0
    %592 = vmatpush1.msra.mxu0 0.0
    %593 = vmatprep.subr.mxu0 0.0
    %594 = vmatpush1.msra.mxu0 0.0
    %595 = vmatprep.subr.mxu0 0.0
    %596 = vmatpush1.msra.mxu0 0.0
    %597 = vmatprep.subr.mxu0 0.0
    %598 = vmatpush1.msra.mxu0 0.0
    %599 = vmatprep.subr.mxu0 0.0
    %600 = vmatpush1.msra.mxu0 0.0
    %601 = vmatprep.subr.mxu0 0.0
    %602 = vmatpush1.msra.mxu0 0.0
    %603 = vmatprep.subr.mxu0 0.0
    %604 = vmatpush1.msra.mxu0 0.0
    %605 = vmatprep.mubr.f32.mxu0 0.0
    %606 = vmatmul.mubr.f32.gmra.mrb[0].mxu0 %v464
    %v607 = vpop.f32.mrb[0].mxu0
    %v608 = vadd.f32 0.0, %v607
    %v609 = vpop.f32.mrb[0].mxu0
    %v610 = vadd.f32 0.0, %v609
    %611 = vdwg.mxu0
    %v612 = vadd.f32 %v466, %v537
    %v613 = vadd.f32 %v467, %v539
    %v614 = vadd.f32 %v468, %v608
    %v615 = vadd.f32 %v469, %v610
    %v616 = vtanh.pop %v612
    %v617 = vtanh.pop %v613
    %v618 = vtanh.pop %v614
    %v619 = vtanh.pop %v615
    %v620 = vmul.f32 %v616, 0.5
    %v621 = vadd.f32 %v620, 0.5
    %v622 = vmul.f32 %v617, 0.5
    %v623 = vadd.f32 %v622, 0.5
    %v624 = vmul.f32 %v619, 0.5
    %v625 = vadd.f32 %v624, 0.5
    %v626 = vmul.f32 %v623, %v462
    %v627 = vmul.f32 %v621, %v618
    %v628 = vadd.f32 %v626, %v627
    %v629 = vtanh.pop %v628
    %v630 = vmul.f32 %v625, %v629
    %s631 = scalar_lea.vmem [#allocation2], 64
    %v632 = vld [vmem:[%s631] sm:$0xff]
    %v633 = vld [vmem:[%s631 + $0x8] sm:$0xff]
    %v634 = vld [vmem:[%s631 + $0x10] sm:$0xff]
    %v635 = vld [vmem:[%s631 + $0x18] sm:$0xff]
    %636 = vmatprep.subr.mxu0 %v241
    %637 = vmatpush1.msra.mxu0 %v240
    %638 = vmatprep.subr.mxu0 %v245
    %639 = vmatpush1.msra.mxu0 %v244
    %640 = vmatprep.subr.mxu0 %v249
    %641 = vmatpush1.msra.mxu0 %v248
    %642 = vmatprep.subr.mxu0 %v253
    %643 = vmatpush1.msra.mxu0 %v252
    %644 = vmatprep.subr.mxu0 %v257
    %645 = vmatpush1.msra.mxu0 %v256
    %646 = vmatprep.subr.mxu0 %v261
    %647 = vmatpush1.msra.mxu0 %v260
    %648 = vmatprep.subr.mxu0 %v265
    %649 = vmatpush1.msra.mxu0 %v264
    %650 = vmatprep.subr.mxu0 %v269
    %651 = vmatpush1.msra.mxu0 %v268
    %652 = vmatprep.subr.mxu0 %v273
    %653 = vmatpush1.msra.mxu0 %v272
    %654 = vmatprep.subr.mxu0 %v277
    %655 = vmatpush1.msra.mxu0 %v276
    %656 = vmatprep.subr.mxu0 %v281
    %657 = vmatpush1.msra.mxu0 %v280
    %658 = vmatprep.subr.mxu0 %v285
    %659 = vmatpush1.msra.mxu0 %v284
    %660 = vmatprep.subr.mxu0 %v289
    %661 = vmatpush1.msra.mxu0 %v288
    %662 = vmatprep.subr.mxu0 %v293
    %663 = vmatpush1.msra.mxu0 %v292
    %664 = vmatprep.subr.mxu0 %v297
    %665 = vmatpush1.msra.mxu0 %v296
    %666 = vmatprep.subr.mxu0 %v301
    %667 = vmatpush1.msra.mxu0 %v300
    %668 = vmatprep.subr.mxu0 0.0
    %669 = vmatpush1.msra.mxu0 0.0
    %670 = vmatprep.subr.mxu0 0.0
    %671 = vmatpush1.msra.mxu0 0.0
    %672 = vmatprep.subr.mxu0 0.0
    %673 = vmatpush1.msra.mxu0 0.0
    %674 = vmatprep.subr.mxu0 0.0
    %675 = vmatpush1.msra.mxu0 0.0
    %676 = vmatprep.subr.mxu0 0.0
    %677 = vmatpush1.msra.mxu0 0.0
    %678 = vmatprep.subr.mxu0 0.0
    %679 = vmatpush1.msra.mxu0 0.0
    %680 = vmatprep.subr.mxu0 0.0
    %681 = vmatpush1.msra.mxu0 0.0
    %682 = vmatprep.subr.mxu0 0.0
    %683 = vmatpush1.msra.mxu0 0.0
    %684 = vmatprep.subr.mxu0 0.0
    %685 = vmatpush1.msra.mxu0 0.0
    %686 = vmatprep.subr.mxu0 0.0
    %687 = vmatpush1.msra.mxu0 0.0
    %688 = vmatprep.subr.mxu0 0.0
    %689 = vmatpush1.msra.mxu0 0.0
    %690 = vmatprep.subr.mxu0 0.0
    %691 = vmatpush1.msra.mxu0 0.0
    %692 = vmatprep.subr.mxu0 0.0
    %693 = vmatpush1.msra.mxu0 0.0
    %694 = vmatprep.subr.mxu0 0.0
    %695 = vmatpush1.msra.mxu0 0.0
    %696 = vmatprep.subr.mxu0 0.0
    %697 = vmatpush1.msra.mxu0 0.0
    %698 = vmatprep.subr.mxu0 0.0
    %699 = vmatpush1.msra.mxu0 0.0
    %700 = vmatprep.mubr.f32.mxu0 0.0
    %701 = vmatmul.mubr.f32.gmra.mrb[0].mxu0 %v630
    %v702 = vpop.f32.mrb[0].mxu0
    %v703 = vadd.f32 0.0, %v702
    %v704 = vpop.f32.mrb[0].mxu0
    %v705 = vadd.f32 0.0, %v704
    %706 = vdwg.mxu0
    %707 = vmatprep.subr.mxu0 %v243
    %708 = vmatpush1.msra.mxu0 %v242
    %709 = vmatprep.subr.mxu0 %v247
    %710 = vmatpush1.msra.mxu0 %v246
    %711 = vmatprep.subr.mxu0 %v251
    %712 = vmatpush1.msra.mxu0 %v250
    %713 = vmatprep.subr.mxu0 %v255
    %714 = vmatpush1.msra.mxu0 %v254
    %715 = vmatprep.subr.mxu0 %v259
    %716 = vmatpush1.msra.mxu0 %v258
    %717 = vmatprep.subr.mxu0 %v263
    %718 = vmatpush1.msra.mxu0 %v262
    %719 = vmatprep.subr.mxu0 %v267
    %720 = vmatpush1.msra.mxu0 %v266
    %721 = vmatprep.subr.mxu0 %v271
    %722 = vmatpush1.msra.mxu0 %v270
    %723 = vmatprep.subr.mxu0 %v275
    %724 = vmatpush1.msra.mxu0 %v274
    %725 = vmatprep.subr.mxu0 %v279
    %726 = vmatpush1.msra.mxu0 %v278
    %727 = vmatprep.subr.mxu0 %v283
    %728 = vmatpush1.msra.mxu0 %v282
    %729 = vmatprep.subr.mxu0 %v287
    %730 = vmatpush1.msra.mxu0 %v286
    %731 = vmatprep.subr.mxu0 %v291
    %732 = vmatpush1.msra.mxu0 %v290
    %733 = vmatprep.subr.mxu0 %v295
    %734 = vmatpush1.msra.mxu0 %v294
    %735 = vmatprep.subr.mxu0 %v299
    %736 = vmatpush1.msra.mxu0 %v298
    %737 = vmatprep.subr.mxu0 %v303
    %738 = vmatpush1.msra.mxu0 %v302
    %739 = vmatprep.subr.mxu0 0.0
    %740 = vmatpush1.msra.mxu0 0.0
    %741 = vmatprep.subr.mxu0 0.0
    %742 = vmatpush1.msra.mxu0 0.0
    %743 = vmatprep.subr.mxu0 0.0
    %744 = vmatpush1.msra.mxu0 0.0
    %745 = vmatprep.subr.mxu0 0.0
    %746 = vmatpush1.msra.mxu0 0.0
    %747 = vmatprep.subr.mxu0 0.0
    %748 = vmatpush1.msra.mxu0 0.0
    %749 = vmatprep.subr.mxu0 0.0
    %750 = vmatpush1.msra.mxu0 0.0
    %751 = vmatprep.subr.mxu0 0.0
    %752 = vmatpush1.msra.mxu0 0.0
    %753 = vmatprep.subr.mxu0 0.0
    %754 = vmatpush1.msra.mxu0 0.0
    %755 = vmatprep.subr.mxu0 0.0
    %756 = vmatpush1.msra.mxu0 0.0
    %757 = vmatprep.subr.mxu0 0.0
    %758 = vmatpush1.msra.mxu0 0.0
    %759 = vmatprep.subr.mxu0 0.0
    %760 = vmatpush1.msra.mxu0 0.0
    %761 = vmatprep.subr.mxu0 0.0
    %762 = vmatpush1.msra.mxu0 0.0
    %763 = vmatprep.subr.mxu0 0.0
    %764 = vmatpush1.msra.mxu0 0.0
    %765 = vmatprep.subr.mxu0 0.0
    %766 = vmatpush1.msra.mxu0 0.0
    %767 = vmatprep.subr.mxu0 0.0
    %768 = vmatpush1.msra.mxu0 0.0
    %769 = vmatprep.subr.mxu0 0.0
    %770 = vmatpush1.msra.mxu0 0.0
    %771 = vmatprep.mubr.f32.mxu0 0.0
    %772 = vmatmul.mubr.f32.gmra.mrb[0].mxu0 %v630
    %v773 = vpop.f32.mrb[0].mxu0
    %v774 = vadd.f32 0.0, %v773
    %v775 = vpop.f32.mrb[0].mxu0
    %v776 = vadd.f32 0.0, %v775
    %777 = vdwg.mxu0
    %v778 = vadd.f32 %v632, %v703
    %v779 = vadd.f32 %v633, %v705
    %v780 = vadd.f32 %v634, %v774
    %v781 = vadd.f32 %v635, %v776
    %v782 = vtanh.pop %v778
    %v783 = vtanh.pop %v779
    %v784 = vtanh.pop %v780
    %v785 = vtanh.pop %v781
    %v786 = vmul.f32 %v782, 0.5
    %v787 = vadd.f32 %v786, 0.5
    %v788 = vmul.f32 %v783, 0.5
    %v789 = vadd.f32 %v788, 0.5
    %v790 = vmul.f32 %v785, 0.5
    %v791 = vadd.f32 %v790, 0.5
    %v792 = vmul.f32 %v789, %v628
    %v793 = vmul.f32 %v787, %v784
    %v794 = vadd.f32 %v792, %v793
    %v795 = vtanh.pop %v794
    %v796 = vmul.f32 %v791, %v795
    %s797 = scalar_lea.vmem [#allocation2], 96
    %v798 = vld [vmem:[%s797] sm:$0xff]
    %v799 = vld [vmem:[%s797 + $0x8] sm:$0xff]
    %v800 = vld [vmem:[%s797 + $0x10] sm:$0xff]
    %v801 = vld [vmem:[%s797 + $0x18] sm:$0xff]
    %802 = vmatprep.subr.mxu0 %v241
    %803 = vmatpush1.msra.mxu0 %v240
    %804 = vmatprep.subr.mxu0 %v245
    %805 = vmatpush1.msra.mxu0 %v244
    %806 = vmatprep.subr.mxu0 %v249
    %807 = vmatpush1.msra.mxu0 %v248
    %808 = vmatprep.subr.mxu0 %v253
    %809 = vmatpush1.msra.mxu0 %v252
    %810 = vmatprep.subr.mxu0 %v257
    %811 = vmatpush1.msra.mxu0 %v256
    %812 = vmatprep.subr.mxu0 %v261
    %813 = vmatpush1.msra.mxu0 %v260
    %814 = vmatprep.subr.mxu0 %v265
    %815 = vmatpush1.msra.mxu0 %v264
    %816 = vmatprep.subr.mxu0 %v269
    %817 = vmatpush1.msra.mxu0 %v268
    %818 = vmatprep.subr.mxu0 %v273
    %819 = vmatpush1.msra.mxu0 %v272
    %820 = vmatprep.subr.mxu0 %v277
    %821 = vmatpush1.msra.mxu0 %v276
    %822 = vmatprep.subr.mxu0 %v281
    %823 = vmatpush1.msra.mxu0 %v280
    %824 = vmatprep.subr.mxu0 %v285
    %825 = vmatpush1.msra.mxu0 %v284
    %826 = vmatprep.subr.mxu0 %v289
    %827 = vmatpush1.msra.mxu0 %v288
    %828 = vmatprep.subr.mxu0 %v293
    %829 = vmatpush1.msra.mxu0 %v292
    %830 = vmatprep.subr.mxu0 %v297
    %831 = vmatpush1.msra.mxu0 %v296
    %832 = vmatprep.subr.mxu0 %v301
    %833 = vmatpush1.msra.mxu0 %v300
    %834 = vmatprep.subr.mxu0 0.0
    %835 = vmatpush1.msra.mxu0 0.0
    %836 = vmatprep.subr.mxu0 0.0
    %837 = vmatpush1.msra.mxu0 0.0
    %838 = vmatprep.subr.mxu0 0.0
    %839 = vmatpush1.msra.mxu0 0.0
    %840 = vmatprep.subr.mxu0 0.0
    %841 = vmatpush1.msra.mxu0 0.0
    %842 = vmatprep.subr.mxu0 0.0
    %843 = vmatpush1.msra.mxu0 0.0
    %844 = vmatprep.subr.mxu0 0.0
    %845 = vmatpush1.msra.mxu0 0.0
    %846 = vmatprep.subr.mxu0 0.0
    %847 = vmatpush1.msra.mxu0 0.0
    %848 = vmatprep.subr.mxu0 0.0
    %849 = vmatpush1.msra.mxu0 0.0
    %850 = vmatprep.subr.mxu0 0.0
    %851 = vmatpush1.msra.mxu0 0.0
    %852 = vmatprep.subr.mxu0 0.0
    %853 = vmatpush1.msra.mxu0 0.0
    %854 = vmatprep.subr.mxu0 0.0
    %855 = vmatpush1.msra.mxu0 0.0
    %856 = vmatprep.subr.mxu0 0.0
    %857 = vmatpush1.msra.mxu0 0.0
    %858 = vmatprep.subr.mxu0 0.0
    %859 = vmatpush1.msra.mxu0 0.0
    %860 = vmatprep.subr.mxu0 0.0
    %861 = vmatpush1.msra.mxu0 0.0
    %862 = vmatprep.subr.mxu0 0.0
    %863 = vmatpush1.msra.mxu0 0.0
    %864 = vmatprep.subr.mxu0 0.0
    %865 = vmatpush1.msra.mxu0 0.0
    %866 = vmatprep.mubr.f32.mxu0 0.0
    %867 = vmatmul.mubr.f32.gmra.mrb[0].mxu0 %v796
    %v868 = vpop.f32.mrb[0].mxu0
    %v869 = vadd.f32 0.0, %v868
    %v870 = vpop.f32.mrb[0].mxu0
    %v871 = vadd.f32 0.0, %v870
    %872 = vdwg.mxu0
    %873 = vmatprep.subr.mxu0 %v243
    %874 = vmatpush1.msra.mxu0 %v242
    %875 = vmatprep.subr.mxu0 %v247
    %876 = vmatpush1.msra.mxu0 %v246
    %877 = vmatprep.subr.mxu0 %v251
    %878 = vmatpush1.msra.mxu0 %v250
    %879 = vmatprep.subr.mxu0 %v255
    %880 = vmatpush1.msra.mxu0 %v254
    %881 = vmatprep.subr.mxu0 %v259
    %882 = vmatpush1.msra.mxu0 %v258
    %883 = vmatprep.subr.mxu0 %v263
    %884 = vmatpush1.msra.mxu0 %v262
    %885 = vmatprep.subr.mxu0 %v267
    %886 = vmatpush1.msra.mxu0 %v266
    %887 = vmatprep.subr.mxu0 %v271
    %888 = vmatpush1.msra.mxu0 %v270
    %889 = vmatprep.subr.mxu0 %v275
    %890 = vmatpush1.msra.mxu0 %v274
    %891 = vmatprep.subr.mxu0 %v279
    %892 = vmatpush1.msra.mxu0 %v278
    %893 = vmatprep.subr.mxu0 %v283
    %894 = vmatpush1.msra.mxu0 %v282
    %895 = vmatprep.subr.mxu0 %v287
    %896 = vmatpush1.msra.mxu0 %v286
    %897 = vmatprep.subr.mxu0 %v291
    %898 = vmatpush1.msra.mxu0 %v290
    %899 = vmatprep.subr.mxu0 %v295
    %900 = vmatpush1.msra.mxu0 %v294
    %901 = vmatprep.subr.mxu0 %v299
    %902 = vmatpush1.msra.mxu0 %v298
    %903 = vmatprep.subr.mxu0 %v303
    %904 = vmatpush1.msra.mxu0 %v302
    %905 = vmatprep.subr.mxu0 0.0
    %906 = vmatpush1.msra.mxu0 0.0
    %907 = vmatprep.subr.mxu0 0.0
    %908 = vmatpush1.msra.mxu0 0.0
    %909 = vmatprep.subr.mxu0 0.0
    %910 = vmatpush1.msra.mxu0 0.0
    %911 = vmatprep.subr.mxu0 0.0
    %912 = vmatpush1.msra.mxu0 0.0
    %913 = vmatprep.subr.mxu0 0.0
    %914 = vmatpush1.msra.mxu0 0.0
    %915 = vmatprep.subr.mxu0 0.0
    %916 = vmatpush1.msra.mxu0 0.0
    %917 = vmatprep.subr.mxu0 0.0
    %918 = vmatpush1.msra.mxu0 0.0
    %919 = vmatprep.subr.mxu0 0.0
    %920 = vmatpush1.msra.mxu0 0.0
    %921 = vmatprep.subr.mxu0 0.0
    %922 = vmatpush1.msra.mxu0 0.0
    %923 = vmatprep.subr.mxu0 0.0
    %924 = vmatpush1.msra.mxu0 0.0
    %925 = vmatprep.subr.mxu0 0.0
    %926 = vmatpush1.msra.mxu0 0.0
    %927 = vmatprep.subr.mxu0 0.0
    %928 = vmatpush1.msra.mxu0 0.0
    %929 = vmatprep.subr.mxu0 0.0
    %930 = vmatpush1.msra.mxu0 0.0
    %931 = vmatprep.subr.mxu0 0.0
    %932 = vmatpush1.msra.mxu0 0.0
    %933 = vmatprep.subr.mxu0 0.0
    %934 = vmatpush1.msra.mxu0 0.0
    %935 = vmatprep.subr.mxu0 0.0
    %936 = vmatpush1.msra.mxu0 0.0
    %937 = vmatprep.mubr.f32.mxu0 0.0
    %938 = vmatmul.mubr.f32.gmra.mrb[0].mxu0 %v796
    %v939 = vpop.f32.mrb[0].mxu0
    %v940 = vadd.f32 0.0, %v939
    %v941 = vpop.f32.mrb[0].mxu0
    %v942 = vadd.f32 0.0, %v941
    %943 = vdwg.mxu0
    %v944 = vadd.f32 %v798, %v869
    %v945 = vadd.f32 %v799, %v871
    %v946 = vadd.f32 %v800, %v940
    %v947 = vadd.f32 %v801, %v942
    %v948 = vtanh.pop %v944
    %v949 = vtanh.pop %v945
    %v950 = vtanh.pop %v946
    %v951 = vtanh.pop %v947
    %v952 = vmul.f32 %v948, 0.5
    %v953 = vadd.f32 %v952, 0.5
    %v954 = vmul.f32 %v949, 0.5
    %v955 = vadd.f32 %v954, 0.5
    %v956 = vmul.f32 %v951, 0.5
    %v957 = vadd.f32 %v956, 0.5
    %v958 = vmul.f32 %v955, %v794
    %v959 = vmul.f32 %v953, %v950
    %v960 = vadd.f32 %v958, %v959
    %v961 = vtanh.pop %v960
    %v962 = vmul.f32 %v957, %v961
    %s963 = scalar_lea.vmem [#allocation2], 128
    %v964 = vld [vmem:[%s963] sm:$0xff]
    %v965 = vld [vmem:[%s963 + $0x8] sm:$0xff]
    %v966 = vld [vmem:[%s963 + $0x10] sm:$0xff]
    %v967 = vld [vmem:[%s963 + $0x18] sm:$0xff]
    %968 = vmatprep.subr.mxu0 %v241
    %969 = vmatpush1.msra.mxu0 %v240
    %970 = vmatprep.subr.mxu0 %v245
    %971 = vmatpush1.msra.mxu0 %v244
    %972 = vmatprep.subr.mxu0 %v249
    %973 = vmatpush1.msra.mxu0 %v248
    %974 = vmatprep.subr.mxu0 %v253
    %975 = vmatpush1.msra.mxu0 %v252
    %976 = vmatprep.subr.mxu0 %v257
    %977 = vmatpush1.msra.mxu0 %v256
    %978 = vmatprep.subr.mxu0 %v261
    %979 = vmatpush1.msra.mxu0 %v260
    %980 = vmatprep.subr.mxu0 %v265
    %981 = vmatpush1.msra.mxu0 %v264
    %982 = vmatprep.subr.mxu0 %v269
    %983 = vmatpush1.msra.mxu0 %v268
    %984 = vmatprep.subr.mxu0 %v273
    %985 = vmatpush1.msra.mxu0 %v272
    %986 = vmatprep.subr.mxu0 %v277
    %987 = vmatpush1.msra.mxu0 %v276
    %988 = vmatprep.subr.mxu0 %v281
    %989 = vmatpush1.msra.mxu0 %v280
    %990 = vmatprep.subr.mxu0 %v285
    %991 = vmatpush1.msra.mxu0 %v284
    %992 = vmatprep.subr.mxu0 %v289
    %993 = vmatpush1.msra.mxu0 %v288
    %994 = vmatprep.subr.mxu0 %v293
    %995 = vmatpush1.msra.mxu0 %v292
    %996 = vmatprep.subr.mxu0 %v297
    %997 = vmatpush1.msra.mxu0 %v296
    %998 = vmatprep.subr.mxu0 %v301
    %999 = vmatpush1.msra.mxu0 %v300
    %1000 = vmatprep.subr.mxu0 0.0
    %1001 = vmatpush1.msra.mxu0 0.0
    %1002 = vmatprep.subr.mxu0 0.0
    %1003 = vmatpush1.msra.mxu0 0.0
    %1004 = vmatprep.subr.mxu0 0.0
    %1005 = vmatpush1.msra.mxu0 0.0
    %1006 = vmatprep.subr.mxu0 0.0
    %1007 = vmatpush1.msra.mxu0 0.0
    %1008 = vmatprep.subr.mxu0 0.0
    %1009 = vmatpush1.msra.mxu0 0.0
    %1010 = vmatprep.subr.mxu0 0.0
    %1011 = vmatpush1.msra.mxu0 0.0
    %1012 = vmatprep.subr.mxu0 0.0
    %1013 = vmatpush1.msra.mxu0 0.0
    %1014 = vmatprep.subr.mxu0 0.0
    %1015 = vmatpush1.msra.mxu0 0.0
    %1016 = vmatprep.subr.mxu0 0.0
    %1017 = vmatpush1.msra.mxu0 0.0
    %1018 = vmatprep.subr.mxu0 0.0
    %1019 = vmatpush1.msra.mxu0 0.0
    %1020 = vmatprep.subr.mxu0 0.0
    %1021 = vmatpush1.msra.mxu0 0.0
    %1022 = vmatprep.subr.mxu0 0.0
    %1023 = vmatpush1.msra.mxu0 0.0
    %1024 = vmatprep.subr.mxu0 0.0
    %1025 = vmatpush1.msra.mxu0 0.0
    %1026 = vmatprep.subr.mxu0 0.0
    %1027 = vmatpush1.msra.mxu0 0.0
    %1028 = vmatprep.subr.mxu0 0.0
    %1029 = vmatpush1.msra.mxu0 0.0
    %1030 = vmatprep.subr.mxu0 0.0
    %1031 = vmatpush1.msra.mxu0 0.0
    %1032 = vmatprep.mubr.f32.mxu0 0.0
    %1033 = vmatmul.mubr.f32.gmra.mrb[0].mxu0 %v962
    %v1034 = vpop.f32.mrb[0].mxu0
    %v1035 = vadd.f32 0.0, %v1034
    %v1036 = vpop.f32.mrb[0].mxu0
    %v1037 = vadd.f32 0.0, %v1036
    %1038 = vdwg.mxu0
    %1039 = vmatprep.subr.mxu0 %v243
    %1040 = vmatpush1.msra.mxu0 %v242
    %1041 = vmatprep.subr.mxu0 %v247
    %1042 = vmatpush1.msra.mxu0 %v246
    %1043 = vmatprep.subr.mxu0 %v251
    %1044 = vmatpush1.msra.mxu0 %v250
    %1045 = vmatprep.subr.mxu0 %v255
    %1046 = vmatpush1.msra.mxu0 %v254
    %1047 = vmatprep.subr.mxu0 %v259
    %1048 = vmatpush1.msra.mxu0 %v258
    %1049 = vmatprep.subr.mxu0 %v263
    %1050 = vmatpush1.msra.mxu0 %v262
    %1051 = vmatprep.subr.mxu0 %v267
    %1052 = vmatpush1.msra.mxu0 %v266
    %1053 = vmatprep.subr.mxu0 %v271
    %1054 = vmatpush1.msra.mxu0 %v270
    %1055 = vmatprep.subr.mxu0 %v275
    %1056 = vmatpush1.msra.mxu0 %v274
    %1057 = vmatprep.subr.mxu0 %v279
    %1058 = vmatpush1.msra.mxu0 %v278
    %1059 = vmatprep.subr.mxu0 %v283
    %1060 = vmatpush1.msra.mxu0 %v282
    %1061 = vmatprep.subr.mxu0 %v287
    %1062 = vmatpush1.msra.mxu0 %v286
    %1063 = vmatprep.subr.mxu0 %v291
    %1064 = vmatpush1.msra.mxu0 %v290
    %1065 = vmatprep.subr.mxu0 %v295
    %1066 = vmatpush1.msra.mxu0 %v294
    %1067 = vmatprep.subr.mxu0 %v299
    %1068 = vmatpush1.msra.mxu0 %v298
    %1069 = vmatprep.subr.mxu0 %v303
    %1070 = vmatpush1.msra.mxu0 %v302
    %1071 = vmatprep.subr.mxu0 0.0
    %1072 = vmatpush1.msra.mxu0 0.0
    %1073 = vmatprep.subr.mxu0 0.0
    %1074 = vmatpush1.msra.mxu0 0.0
    %1075 = vmatprep.subr.mxu0 0.0
    %1076 = vmatpush1.msra.mxu0 0.0
    %1077 = vmatprep.subr.mxu0 0.0
    %1078 = vmatpush1.msra.mxu0 0.0
    %1079 = vmatprep.subr.mxu0 0.0
    %1080 = vmatpush1.msra.mxu0 0.0
    %1081 = vmatprep.subr.mxu0 0.0
    %1082 = vmatpush1.msra.mxu0 0.0
    %1083 = vmatprep.subr.mxu0 0.0
    %1084 = vmatpush1.msra.mxu0 0.0
    %1085 = vmatprep.subr.mxu0 0.0
    %1086 = vmatpush1.msra.mxu0 0.0
    %1087 = vmatprep.subr.mxu0 0.0
    %1088 = vmatpush1.msra.mxu0 0.0
    %1089 = vmatprep.subr.mxu0 0.0
    %1090 = vmatpush1.msra.mxu0 0.0
    %1091 = vmatprep.subr.mxu0 0.0
    %1092 = vmatpush1.msra.mxu0 0.0
    %1093 = vmatprep.subr.mxu0 0.0
    %1094 = vmatpush1.msra.mxu0 0.0
    %1095 = vmatprep.subr.mxu0 0.0
    %1096 = vmatpush1.msra.mxu0 0.0
    %1097 = vmatprep.subr.mxu0 0.0
    %1098 = vmatpush1.msra.mxu0 0.0
    %1099 = vmatprep.subr.mxu0 0.0
    %1100 = vmatpush1.msra.mxu0 0.0
    %1101 = vmatprep.subr.mxu0 0.0
    %1102 = vmatpush1.msra.mxu0 0.0
    %1103 = vmatprep.mubr.f32.mxu0 0.0
    %1104 = vmatmul.mubr.f32.gmra.mrb[0].mxu0 %v962
    %v1105 = vpop.f32.mrb[0].mxu0
    %v1106 = vadd.f32 0.0, %v1105
    %v1107 = vpop.f32.mrb[0].mxu0
    %v1108 = vadd.f32 0.0, %v1107
    %1109 = vdwg.mxu0
    %v1110 = vadd.f32 %v964, %v1035
    %v1111 = vadd.f32 %v965, %v1037
    %v1112 = vadd.f32 %v966, %v1106
    %v1113 = vadd.f32 %v967, %v1108
    %v1114 = vtanh.pop %v1110
    %v1115 = vtanh.pop %v1111
    %v1116 = vtanh.pop %v1112
    %v1117 = vtanh.pop %v1113
    %v1118 = vmul.f32 %v1114, 0.5
    %v1119 = vadd.f32 %v1118, 0.5
    %v1120 = vmul.f32 %v1115, 0.5
    %v1121 = vadd.f32 %v1120, 0.5
    %v1122 = vmul.f32 %v1117, 0.5
    %v1123 = vadd.f32 %v1122, 0.5
    %v1124 = vmul.f32 %v1121, %v960
    %v1125 = vmul.f32 %v1119, %v1116
    %v1126 = vadd.f32 %v1124, %v1125
    %v1127 = vtanh.pop %v1126
    %v1128 = vmul.f32 %v1123, %v1127
    %s1129 = scalar_lea.vmem [#allocation2], 160
    %v1130 = vld [vmem:[%s1129] sm:$0xff]
    %v1131 = vld [vmem:[%s1129 + $0x8] sm:$0xff]
    %v1132 = vld [vmem:[%s1129 + $0x10] sm:$0xff]
    %v1133 = vld [vmem:[%s1129 + $0x18] sm:$0xff]
    %1134 = vmatprep.subr.mxu0 %v241
    %1135 = vmatpush1.msra.mxu0 %v240
    %1136 = vmatprep.subr.mxu0 %v245
    %1137 = vmatpush1.msra.mxu0 %v244
    %1138 = vmatprep.subr.mxu0 %v249
    %1139 = vmatpush1.msra.mxu0 %v248
    %1140 = vmatprep.subr.mxu0 %v253
    %1141 = vmatpush1.msra.mxu0 %v252
    %1142 = vmatprep.subr.mxu0 %v257
    %1143 = vmatpush1.msra.mxu0 %v256
    %1144 = vmatprep.subr.mxu0 %v261
    %1145 = vmatpush1.msra.mxu0 %v260
    %1146 = vmatprep.subr.mxu0 %v265
    %1147 = vmatpush1.msra.mxu0 %v264
    %1148 = vmatprep.subr.mxu0 %v269
    %1149 = vmatpush1.msra.mxu0 %v268
    %1150 = vmatprep.subr.mxu0 %v273
    %1151 = vmatpush1.msra.mxu0 %v272
    %1152 = vmatprep.subr.mxu0 %v277
    %1153 = vmatpush1.msra.mxu0 %v276
    %1154 = vmatprep.subr.mxu0 %v281
    %1155 = vmatpush1.msra.mxu0 %v280
    %1156 = vmatprep.subr.mxu0 %v285
    %1157 = vmatpush1.msra.mxu0 %v284
    %1158 = vmatprep.subr.mxu0 %v289
    %1159 = vmatpush1.msra.mxu0 %v288
    %1160 = vmatprep.subr.mxu0 %v293
    %1161 = vmatpush1.msra.mxu0 %v292
    %1162 = vmatprep.subr.mxu0 %v297
    %1163 = vmatpush1.msra.mxu0 %v296
    %1164 = vmatprep.subr.mxu0 %v301
    %1165 = vmatpush1.msra.mxu0 %v300
    %1166 = vmatprep.subr.mxu0 0.0
    %1167 = vmatpush1.msra.mxu0 0.0
    %1168 = vmatprep.subr.mxu0 0.0
    %1169 = vmatpush1.msra.mxu0 0.0
    %1170 = vmatprep.subr.mxu0 0.0
    %1171 = vmatpush1.msra.mxu0 0.0
    %1172 = vmatprep.subr.mxu0 0.0
    %1173 = vmatpush1.msra.mxu0 0.0
    %1174 = vmatprep.subr.mxu0 0.0
    %1175 = vmatpush1.msra.mxu0 0.0
    %1176 = vmatprep.subr.mxu0 0.0
    %1177 = vmatpush1.msra.mxu0 0.0
    %1178 = vmatprep.subr.mxu0 0.0
    %1179 = vmatpush1.msra.mxu0 0.0
    %1180 = vmatprep.subr.mxu0 0.0
    %1181 = vmatpush1.msra.mxu0 0.0
    %1182 = vmatprep.subr.mxu0 0.0
    %1183 = vmatpush1.msra.mxu0 0.0
    %1184 = vmatprep.subr.mxu0 0.0
    %1185 = vmatpush1.msra.mxu0 0.0
    %1186 = vmatprep.subr.mxu0 0.0
    %1187 = vmatpush1.msra.mxu0 0.0
    %1188 = vmatprep.subr.mxu0 0.0
    %1189 = vmatpush1.msra.mxu0 0.0
    %1190 = vmatprep.subr.mxu0 0.0
    %1191 = vmatpush1.msra.mxu0 0.0
    %1192 = vmatprep.subr.mxu0 0.0
    %1193 = vmatpush1.msra.mxu0 0.0
    %1194 = vmatprep.subr.mxu0 0.0
    %1195 = vmatpush1.msra.mxu0 0.0
    %1196 = vmatprep.subr.mxu0 0.0
    %1197 = vmatpush1.msra.mxu0 0.0
    %1198 = vmatprep.mubr.f32.mxu0 0.0
    %1199 = vmatmul.mubr.f32.gmra.mrb[0].mxu0 %v1128
    %v1200 = vpop.f32.mrb[0].mxu0
    %v1201 = vadd.f32 0.0, %v1200
    %v1202 = vpop.f32.mrb[0].mxu0
    %v1203 = vadd.f32 0.0, %v1202
    %1204 = vdwg.mxu0
    %1205 = vmatprep.subr.mxu0 %v243
    %1206 = vmatpush1.msra.mxu0 %v242
    %1207 = vmatprep.subr.mxu0 %v247
    %1208 = vmatpush1.msra.mxu0 %v246
    %1209 = vmatprep.subr.mxu0 %v251
    %1210 = vmatpush1.msra.mxu0 %v250
    %1211 = vmatprep.subr.mxu0 %v255
    %1212 = vmatpush1.msra.mxu0 %v254
    %1213 = vmatprep.subr.mxu0 %v259
    %1214 = vmatpush1.msra.mxu0 %v258
    %1215 = vmatprep.subr.mxu0 %v263
    %1216 = vmatpush1.msra.mxu0 %v262
    %1217 = vmatprep.subr.mxu0 %v267
    %1218 = vmatpush1.msra.mxu0 %v266
    %1219 = vmatprep.subr.mxu0 %v271
    %1220 = vmatpush1.msra.mxu0 %v270
    %1221 = vmatprep.subr.mxu0 %v275
    %1222 = vmatpush1.msra.mxu0 %v274
    %1223 = vmatprep.subr.mxu0 %v279
    %1224 = vmatpush1.msra.mxu0 %v278
    %1225 = vmatprep.subr.mxu0 %v283
    %1226 = vmatpush1.msra.mxu0 %v282
    %1227 = vmatprep.subr.mxu0 %v287
    %1228 = vmatpush1.msra.mxu0 %v286
    %1229 = vmatprep.subr.mxu0 %v291
    %1230 = vmatpush1.msra.mxu0 %v290
    %1231 = vmatprep.subr.mxu0 %v295
    %1232 = vmatpush1.msra.mxu0 %v294
    %1233 = vmatprep.subr.mxu0 %v299
    %1234 = vmatpush1.msra.mxu0 %v298
    %1235 = vmatprep.subr.mxu0 %v303
    %1236 = vmatpush1.msra.mxu0 %v302
    %1237 = vmatprep.subr.mxu0 0.0
    %1238 = vmatpush1.msra.mxu0 0.0
    %1239 = vmatprep.subr.mxu0 0.0
    %1240 = vmatpush1.msra.mxu0 0.0
    %1241 = vmatprep.subr.mxu0 0.0
    %1242 = vmatpush1.msra.mxu0 0.0
    %1243 = vmatprep.subr.mxu0 0.0
    %1244 = vmatpush1.msra.mxu0 0.0
    %1245 = vmatprep.subr.mxu0 0.0
    %1246 = vmatpush1.msra.mxu0 0.0
    %1247 = vmatprep.subr.mxu0 0.0
    %1248 = vmatpush1.msra.mxu0 0.0
    %1249 = vmatprep.subr.mxu0 0.0
    %1250 = vmatpush1.msra.mxu0 0.0
    %1251 = vmatprep.subr.mxu0 0.0
    %1252 = vmatpush1.msra.mxu0 0.0
    %1253 = vmatprep.subr.mxu0 0.0
    %1254 = vmatpush1.msra.mxu0 0.0
    %1255 = vmatprep.subr.mxu0 0.0
    %1256 = vmatpush1.msra.mxu0 0.0
    %1257 = vmatprep.subr.mxu0 0.0
    %1258 = vmatpush1.msra.mxu0 0.0
    %1259 = vmatprep.subr.mxu0 0.0
    %1260 = vmatpush1.msra.mxu0 0.0
    %1261 = vmatprep.subr.mxu0 0.0
    %1262 = vmatpush1.msra.mxu0 0.0
    %1263 = vmatprep.subr.mxu0 0.0
    %1264 = vmatpush1.msra.mxu0 0.0
    %1265 = vmatprep.subr.mxu0 0.0
    %1266 = vmatpush1.msra.mxu0 0.0
    %1267 = vmatprep.subr.mxu0 0.0
    %1268 = vmatpush1.msra.mxu0 0.0
    %1269 = vmatprep.mubr.f32.mxu0 0.0
    %1270 = vmatmul.mubr.f32.gmra.mrb[0].mxu0 %v1128
    %v1271 = vpop.f32.mrb[0].mxu0
    %v1272 = vadd.f32 0.0, %v1271
    %v1273 = vpop.f32.mrb[0].mxu0
    %v1274 = vadd.f32 0.0, %v1273
    %1275 = vdwg.mxu0
    %v1276 = vadd.f32 %v1130, %v1201
    %v1277 = vadd.f32 %v1131, %v1203
    %v1278 = vadd.f32 %v1132, %v1272
    %v1279 = vadd.f32 %v1133, %v1274
    %v1280 = vtanh.pop %v1276
    %v1281 = vtanh.pop %v1277
    %v1282 = vtanh.pop %v1278
    %v1283 = vtanh.pop %v1279
    %v1284 = vmul.f32 %v1280, 0.5
    %v1285 = vadd.f32 %v1284, 0.5
    %v1286 = vmul.f32 %v1281, 0.5
    %v1287 = vadd.f32 %v1286, 0.5
    %v1288 = vmul.f32 %v1283, 0.5
    %v1289 = vadd.f32 %v1288, 0.5
    %v1290 = vmul.f32 %v1287, %v1126
    %v1291 = vmul.f32 %v1285, %v1282
    %v1292 = vadd.f32 %v1290, %v1291
    %v1293 = vtanh.pop %v1292
    %v1294 = vmul.f32 %v1289, %v1293
    %s1295 = scalar_lea.vmem [#allocation2], 192
    %v1296 = vld [vmem:[%s1295] sm:$0xff]
    %v1297 = vld [vmem:[%s1295 + $0x8] sm:$0xff]
    %v1298 = vld [vmem:[%s1295 + $0x10] sm:$0xff]
    %v1299 = vld [vmem:[%s1295 + $0x18] sm:$0xff]
    %1300 = vmatprep.subr.mxu0 %v241
    %1301 = vmatpush1.msra.mxu0 %v240
    %1302 = vmatprep.subr.mxu0 %v245
    %1303 = vmatpush1.msra.mxu0 %v244
    %1304 = vmatprep.subr.mxu0 %v249
    %1305 = vmatpush1.msra.mxu0 %v248
    %1306 = vmatprep.subr.mxu0 %v253
    %1307 = vmatpush1.msra.mxu0 %v252
    %1308 = vmatprep.subr.mxu0 %v257
    %1309 = vmatpush1.msra.mxu0 %v256
    %1310 = vmatprep.subr.mxu0 %v261
    %1311 = vmatpush1.msra.mxu0 %v260
    %1312 = vmatprep.subr.mxu0 %v265
    %1313 = vmatpush1.msra.mxu0 %v264
    %1314 = vmatprep.subr.mxu0 %v269
    %1315 = vmatpush1.msra.mxu0 %v268
    %1316 = vmatprep.subr.mxu0 %v273
    %1317 = vmatpush1.msra.mxu0 %v272
    %1318 = vmatprep.subr.mxu0 %v277
    %1319 = vmatpush1.msra.mxu0 %v276
    %1320 = vmatprep.subr.mxu0 %v281
    %1321 = vmatpush1.msra.mxu0 %v280
    %1322 = vmatprep.subr.mxu0 %v285
    %1323 = vmatpush1.msra.mxu0 %v284
    %1324 = vmatprep.subr.mxu0 %v289
    %1325 = vmatpush1.msra.mxu0 %v288
    %1326 = vmatprep.subr.mxu0 %v293
    %1327 = vmatpush1.msra.mxu0 %v292
    %1328 = vmatprep.subr.mxu0 %v297
    %1329 = vmatpush1.msra.mxu0 %v296
    %1330 = vmatprep.subr.mxu0 %v301
    %1331 = vmatpush1.msra.mxu0 %v300
    %1332 = vmatprep.subr.mxu0 0.0
    %1333 = vmatpush1.msra.mxu0 0.0
    %1334 = vmatprep.subr.mxu0 0.0
    %1335 = vmatpush1.msra.mxu0 0.0
    %1336 = vmatprep.subr.mxu0 0.0
    %1337 = vmatpush1.msra.mxu0 0.0
    %1338 = vmatprep.subr.mxu0 0.0
    %1339 = vmatpush1.msra.mxu0 0.0
    %1340 = vmatprep.subr.mxu0 0.0
    %1341 = vmatpush1.msra.mxu0 0.0
    %1342 = vmatprep.subr.mxu0 0.0
    %1343 = vmatpush1.msra.mxu0 0.0
    %1344 = vmatprep.subr.mxu0 0.0
    %1345 = vmatpush1.msra.mxu0 0.0
    %1346 = vmatprep.subr.mxu0 0.0
    %1347 = vmatpush1.msra.mxu0 0.0
    %1348 = vmatprep.subr.mxu0 0.0
    %1349 = vmatpush1.msra.mxu0 0.0
    %1350 = vmatprep.subr.mxu0 0.0
    %1351 = vmatpush1.msra.mxu0 0.0
    %1352 = vmatprep.subr.mxu0 0.0
    %1353 = vmatpush1.msra.mxu0 0.0
    %1354 = vmatprep.subr.mxu0 0.0
    %1355 = vmatpush1.msra.mxu0 0.0
    %1356 = vmatprep.subr.mxu0 0.0
    %1357 = vmatpush1.msra.mxu0 0.0
    %1358 = vmatprep.subr.mxu0 0.0
    %1359 = vmatpush1.msra.mxu0 0.0
    %1360 = vmatprep.subr.mxu0 0.0
    %1361 = vmatpush1.msra.mxu0 0.0
    %1362 = vmatprep.subr.mxu0 0.0
    %1363 = vmatpush1.msra.mxu0 0.0
    %1364 = vmatprep.mubr.f32.mxu0 0.0
    %1365 = vmatmul.mubr.f32.gmra.mrb[0].mxu0 %v1294
    %v1366 = vpop.f32.mrb[0].mxu0
    %v1367 = vadd.f32 0.0, %v1366
    %v1368 = vpop.f32.mrb[0].mxu0
    %v1369 = vadd.f32 0.0, %v1368
    %1370 = vdwg.mxu0
    %1371 = vmatprep.subr.mxu0 %v243
    %1372 = vmatpush1.msra.mxu0 %v242
    %1373 = vmatprep.subr.mxu0 %v247
    %1374 = vmatpush1.msra.mxu0 %v246
    %1375 = vmatprep.subr.mxu0 %v251
    %1376 = vmatpush1.msra.mxu0 %v250
    %1377 = vmatprep.subr.mxu0 %v255
    %1378 = vmatpush1.msra.mxu0 %v254
    %1379 = vmatprep.subr.mxu0 %v259
    %1380 = vmatpush1.msra.mxu0 %v258
    %1381 = vmatprep.subr.mxu0 %v263
    %1382 = vmatpush1.msra.mxu0 %v262
    %1383 = vmatprep.subr.mxu0 %v267
    %1384 = vmatpush1.msra.mxu0 %v266
    %1385 = vmatprep.subr.mxu0 %v271
    %1386 = vmatpush1.msra.mxu0 %v270
    %1387 = vmatprep.subr.mxu0 %v275
    %1388 = vmatpush1.msra.mxu0 %v274
    %1389 = vmatprep.subr.mxu0 %v279
    %1390 = vmatpush1.msra.mxu0 %v278
    %1391 = vmatprep.subr.mxu0 %v283
    %1392 = vmatpush1.msra.mxu0 %v282
    %1393 = vmatprep.subr.mxu0 %v287
    %1394 = vmatpush1.msra.mxu0 %v286
    %1395 = vmatprep.subr.mxu0 %v291
    %1396 = vmatpush1.msra.mxu0 %v290
    %1397 = vmatprep.subr.mxu0 %v295
    %1398 = vmatpush1.msra.mxu0 %v294
    %1399 = vmatprep.subr.mxu0 %v299
    %1400 = vmatpush1.msra.mxu0 %v298
    %1401 = vmatprep.subr.mxu0 %v303
    %1402 = vmatpush1.msra.mxu0 %v302
    %1403 = vmatprep.subr.mxu0 0.0
    %1404 = vmatpush1.msra.mxu0 0.0
    %1405 = vmatprep.subr.mxu0 0.0
    %1406 = vmatpush1.msra.mxu0 0.0
    %1407 = vmatprep.subr.mxu0 0.0
    %1408 = vmatpush1.msra.mxu0 0.0
    %1409 = vmatprep.subr.mxu0 0.0
    %1410 = vmatpush1.msra.mxu0 0.0
    %1411 = vmatprep.subr.mxu0 0.0
    %1412 = vmatpush1.msra.mxu0 0.0
    %1413 = vmatprep.subr.mxu0 0.0
    %1414 = vmatpush1.msra.mxu0 0.0
    %1415 = vmatprep.subr.mxu0 0.0
    %1416 = vmatpush1.msra.mxu0 0.0
    %1417 = vmatprep.subr.mxu0 0.0
    %1418 = vmatpush1.msra.mxu0 0.0
    %1419 = vmatprep.subr.mxu0 0.0
    %1420 = vmatpush1.msra.mxu0 0.0
    %1421 = vmatprep.subr.mxu0 0.0
    %1422 = vmatpush1.msra.mxu0 0.0
    %1423 = vmatprep.subr.mxu0 0.0
    %1424 = vmatpush1.msra.mxu0 0.0
    %1425 = vmatprep.subr.mxu0 0.0
    %1426 = vmatpush1.msra.mxu0 0.0
    %1427 = vmatprep.subr.mxu0 0.0
    %1428 = vmatpush1.msra.mxu0 0.0
    %1429 = vmatprep.subr.mxu0 0.0
    %1430 = vmatpush1.msra.mxu0 0.0
    %1431 = vmatprep.subr.mxu0 0.0
    %1432 = vmatpush1.msra.mxu0 0.0
    %1433 = vmatprep.subr.mxu0 0.0
    %1434 = vmatpush1.msra.mxu0 0.0
    %1435 = vmatprep.mubr.f32.mxu0 0.0
    %1436 = vmatmul.mubr.f32.gmra.mrb[0].mxu0 %v1294
    %v1437 = vpop.f32.mrb[0].mxu0
    %v1438 = vadd.f32 0.0, %v1437
    %v1439 = vpop.f32.mrb[0].mxu0
    %v1440 = vadd.f32 0.0, %v1439
    %1441 = vdwg.mxu0
    %v1442 = vadd.f32 %v1296, %v1367
    %v1443 = vadd.f32 %v1297, %v1369
    %v1444 = vadd.f32 %v1298, %v1438
    %v1445 = vadd.f32 %v1299, %v1440
    %v1446 = vtanh.pop %v1442
    %v1447 = vtanh.pop %v1443
    %v1448 = vtanh.pop %v1444
    %v1449 = vtanh.pop %v1445
    %v1450 = vmul.f32 %v1446, 0.5
    %v1451 = vadd.f32 %v1450, 0.5
    %v1452 = vmul.f32 %v1447, 0.5
    %v1453 = vadd.f32 %v1452, 0.5
    %v1454 = vmul.f32 %v1449, 0.5
    %v1455 = vadd.f32 %v1454, 0.5
    %v1456 = vmul.f32 %v1453, %v1292
    %v1457 = vmul.f32 %v1451, %v1448
    %v1458 = vadd.f32 %v1456, %v1457
    %v1459 = vtanh.pop %v1458
    %v1460 = vmul.f32 %v1455, %v1459
    %s1461 = scalar_lea.vmem [#allocation2], 224
    %v1462 = vld [vmem:[%s1461] sm:$0xff]
    %v1463 = vld [vmem:[%s1461 + $0x8] sm:$0xff]
    %v1464 = vld [vmem:[%s1461 + $0x10] sm:$0xff]
    %v1465 = vld [vmem:[%s1461 + $0x18] sm:$0xff]
    %1466 = vmatprep.subr.mxu0 %v241
    %1467 = vmatpush1.msra.mxu0 %v240
    %1468 = vmatprep.subr.mxu0 %v245
    %1469 = vmatpush1.msra.mxu0 %v244
    %1470 = vmatprep.subr.mxu0 %v249
    %1471 = vmatpush1.msra.mxu0 %v248
    %1472 = vmatprep.subr.mxu0 %v253
    %1473 = vmatpush1.msra.mxu0 %v252
    %1474 = vmatprep.subr.mxu0 %v257
    %1475 = vmatpush1.msra.mxu0 %v256
    %1476 = vmatprep.subr.mxu0 %v261
    %1477 = vmatpush1.msra.mxu0 %v260
    %1478 = vmatprep.subr.mxu0 %v265
    %1479 = vmatpush1.msra.mxu0 %v264
    %1480 = vmatprep.subr.mxu0 %v269
    %1481 = vmatpush1.msra.mxu0 %v268
    %1482 = vmatprep.subr.mxu0 %v273
    %1483 = vmatpush1.msra.mxu0 %v272
    %1484 = vmatprep.subr.mxu0 %v277
    %1485 = vmatpush1.msra.mxu0 %v276
    %1486 = vmatprep.subr.mxu0 %v281
    %1487 = vmatpush1.msra.mxu0 %v280
    %1488 = vmatprep.subr.mxu0 %v285
    %1489 = vmatpush1.msra.mxu0 %v284
    %1490 = vmatprep.subr.mxu0 %v289
    %1491 = vmatpush1.msra.mxu0 %v288
    %1492 = vmatprep.subr.mxu0 %v293
    %1493 = vmatpush1.msra.mxu0 %v292
    %1494 = vmatprep.subr.mxu0 %v297
    %1495 = vmatpush1.msra.mxu0 %v296
    %1496 = vmatprep.subr.mxu0 %v301
    %1497 = vmatpush1.msra.mxu0 %v300
    %1498 = vmatprep.subr.mxu0 0.0
    %1499 = vmatpush1.msra.mxu0 0.0
    %1500 = vmatprep.subr.mxu0 0.0
    %1501 = vmatpush1.msra.mxu0 0.0
    %1502 = vmatprep.subr.mxu0 0.0
    %1503 = vmatpush1.msra.mxu0 0.0
    %1504 = vmatprep.subr.mxu0 0.0
    %1505 = vmatpush1.msra.mxu0 0.0
    %1506 = vmatprep.subr.mxu0 0.0
    %1507 = vmatpush1.msra.mxu0 0.0
    %1508 = vmatprep.subr.mxu0 0.0
    %1509 = vmatpush1.msra.mxu0 0.0
    %1510 = vmatprep.subr.mxu0 0.0
    %1511 = vmatpush1.msra.mxu0 0.0
    %1512 = vmatprep.subr.mxu0 0.0
    %1513 = vmatpush1.msra.mxu0 0.0
    %1514 = vmatprep.subr.mxu0 0.0
    %1515 = vmatpush1.msra.mxu0 0.0
    %1516 = vmatprep.subr.mxu0 0.0
    %1517 = vmatpush1.msra.mxu0 0.0
    %1518 = vmatprep.subr.mxu0 0.0
    %1519 = vmatpush1.msra.mxu0 0.0
    %1520 = vmatprep.subr.mxu0 0.0
    %1521 = vmatpush1.msra.mxu0 0.0
    %1522 = vmatprep.subr.mxu0 0.0
    %1523 = vmatpush1.msra.mxu0 0.0
    %1524 = vmatprep.subr.mxu0 0.0
    %1525 = vmatpush1.msra.mxu0 0.0
    %1526 = vmatprep.subr.mxu0 0.0
    %1527 = vmatpush1.msra.mxu0 0.0
    %1528 = vmatprep.subr.mxu0 0.0
    %1529 = vmatpush1.msra.mxu0 0.0
    %1530 = vmatprep.mubr.f32.mxu0 0.0
    %1531 = vmatmul.mubr.f32.gmra.mrb[0].mxu0 %v1460
    %v1532 = vpop.f32.mrb[0].mxu0
    %v1533 = vadd.f32 0.0, %v1532
    %v1534 = vpop.f32.mrb[0].mxu0
    %v1535 = vadd.f32 0.0, %v1534
    %1536 = vdwg.mxu0
    %1537 = vmatprep.subr.mxu0 %v243
    %1538 = vmatpush1.msra.mxu0 %v242
    %1539 = vmatprep.subr.mxu0 %v247
    %1540 = vmatpush1.msra.mxu0 %v246
    %1541 = vmatprep.subr.mxu0 %v251
    %1542 = vmatpush1.msra.mxu0 %v250
    %1543 = vmatprep.subr.mxu0 %v255
    %1544 = vmatpush1.msra.mxu0 %v254
    %1545 = vmatprep.subr.mxu0 %v259
    %1546 = vmatpush1.msra.mxu0 %v258
    %1547 = vmatprep.subr.mxu0 %v263
    %1548 = vmatpush1.msra.mxu0 %v262
    %1549 = vmatprep.subr.mxu0 %v267
    %1550 = vmatpush1.msra.mxu0 %v266
    %1551 = vmatprep.subr.mxu0 %v271
    %1552 = vmatpush1.msra.mxu0 %v270
    %1553 = vmatprep.subr.mxu0 %v275
    %1554 = vmatpush1.msra.mxu0 %v274
    %1555 = vmatprep.subr.mxu0 %v279
    %1556 = vmatpush1.msra.mxu0 %v278
    %1557 = vmatprep.subr.mxu0 %v283
    %1558 = vmatpush1.msra.mxu0 %v282
    %1559 = vmatprep.subr.mxu0 %v287
    %1560 = vmatpush1.msra.mxu0 %v286
    %1561 = vmatprep.subr.mxu0 %v291
    %1562 = vmatpush1.msra.mxu0 %v290
    %1563 = vmatprep.subr.mxu0 %v295
    %1564 = vmatpush1.msra.mxu0 %v294
    %1565 = vmatprep.subr.mxu0 %v299
    %1566 = vmatpush1.msra.mxu0 %v298
    %1567 = vmatprep.subr.mxu0 %v303
    %1568 = vmatpush1.msra.mxu0 %v302
    %1569 = vmatprep.subr.mxu0 0.0
    %1570 = vmatpush1.msra.mxu0 0.0
    %1571 = vmatprep.subr.mxu0 0.0
    %1572 = vmatpush1.msra.mxu0 0.0
    %1573 = vmatprep.subr.mxu0 0.0
    %1574 = vmatpush1.msra.mxu0 0.0
    %1575 = vmatprep.subr.mxu0 0.0
    %1576 = vmatpush1.msra.mxu0 0.0
    %1577 = vmatprep.subr.mxu0 0.0
    %1578 = vmatpush1.msra.mxu0 0.0
    %1579 = vmatprep.subr.mxu0 0.0
    %1580 = vmatpush1.msra.mxu0 0.0
    %1581 = vmatprep.subr.mxu0 0.0
    %1582 = vmatpush1.msra.mxu0 0.0
    %1583 = vmatprep.subr.mxu0 0.0
    %1584 = vmatpush1.msra.mxu0 0.0
    %1585 = vmatprep.subr.mxu0 0.0
    %1586 = vmatpush1.msra.mxu0 0.0
    %1587 = vmatprep.subr.mxu0 0.0
    %1588 = vmatpush1.msra.mxu0 0.0
    %1589 = vmatprep.subr.mxu0 0.0
    %1590 = vmatpush1.msra.mxu0 0.0
    %1591 = vmatprep.subr.mxu0 0.0
    %1592 = vmatpush1.msra.mxu0 0.0
    %1593 = vmatprep.subr.mxu0 0.0
    %1594 = vmatpush1.msra.mxu0 0.0
    %1595 = vmatprep.subr.mxu0 0.0
    %1596 = vmatpush1.msra.mxu0 0.0
    %1597 = vmatprep.subr.mxu0 0.0
    %1598 = vmatpush1.msra.mxu0 0.0
    %1599 = vmatprep.subr.mxu0 0.0
    %1600 = vmatpush1.msra.mxu0 0.0
    %1601 = vmatprep.mubr.f32.mxu0 0.0
    %1602 = vmatmul.mubr.f32.gmra.mrb[0].mxu0 %v1460
    %v1603 = vpop.f32.mrb[0].mxu0
    %v1604 = vadd.f32 0.0, %v1603
    %v1605 = vpop.f32.mrb[0].mxu0
    %v1606 = vadd.f32 0.0, %v1605
    %1607 = vdwg.mxu0
    %v1608 = vadd.f32 %v1462, %v1533
    %v1609 = vadd.f32 %v1463, %v1535
    %v1610 = vadd.f32 %v1464, %v1604
    %v1611 = vadd.f32 %v1465, %v1606
    %v1612 = vtanh.pop %v1608
    %v1613 = vtanh.pop %v1609
    %v1614 = vtanh.pop %v1610
    %v1615 = vtanh.pop %v1611
    %v1616 = vmul.f32 %v1612, 0.5
    %v1617 = vadd.f32 %v1616, 0.5
    %v1618 = vmul.f32 %v1613, 0.5
    %v1619 = vadd.f32 %v1618, 0.5
    %v1620 = vmul.f32 %v1615, 0.5
    %v1621 = vadd.f32 %v1620, 0.5
    %v1622 = vmul.f32 %v1619, %v1458
    %v1623 = vmul.f32 %v1617, %v1614
    %v1624 = vadd.f32 %v1622, %v1623
    %v1625 = vtanh.pop %v1624
    %v1626 = vmul.f32 %v1621, %v1625
    %v1627 = vld [vmem:[%s4] sm:$0xff]
    %v1628 = vld [vmem:[%s4 + $0x8] sm:$0xff]
    %v1629 = vld [vmem:[%s4 + $0x10] sm:$0xff]
    %v1630 = vld [vmem:[%s4 + $0x18] sm:$0xff]
    %v1631 = vld [vmem:[%s4 + $0x20] sm:$0xff]
    %v1632 = vld [vmem:[%s4 + $0x28] sm:$0xff]
    %v1633 = vld [vmem:[%s4 + $0x30] sm:$0xff]
    %v1634 = vld [vmem:[%s4 + $0x38] sm:$0xff]
    %v1635 = vld [vmem:[%s4 + $0x40] sm:$0xff]
    %v1636 = vld [vmem:[%s4 + $0x48] sm:$0xff]
    %v1637 = vld [vmem:[%s4 + $0x50] sm:$0xff]
    %v1638 = vld [vmem:[%s4 + $0x58] sm:$0xff]
    %v1639 = vld [vmem:[%s4 + $0x60] sm:$0xff]
    %v1640 = vld [vmem:[%s4 + $0x68] sm:$0xff]
    %v1641 = vld [vmem:[%s4 + $0x70] sm:$0xff]
    %v1642 = vld [vmem:[%s4 + $0x78] sm:$0xff]
    %v1643 = vld [vmem:[#allocation3] sm:$0x1]
    %v1645 = vlaneseq
    %v1646 = vshrl.u32 %v1645, 7
    %v1647 = vsub.s32 0, %v1646
    %v1648 = vrot.slane %v1643, %v1647
    %1650 = vmatprep.subr.mxu0 0.0
    %1651 = vmatpush1.msra.mxu0 %v1627
    %1652 = vmatprep.subr.mxu0 0.0
    %1653 = vmatpush1.msra.mxu0 %v1628
    %1654 = vmatprep.subr.mxu0 0.0
    %1655 = vmatpush1.msra.mxu0 %v1629
    %1656 = vmatprep.subr.mxu0 0.0
    %1657 = vmatpush1.msra.mxu0 %v1630
    %1658 = vmatprep.subr.mxu0 0.0
    %1659 = vmatpush1.msra.mxu0 %v1631
    %1660 = vmatprep.subr.mxu0 0.0
    %1661 = vmatpush1.msra.mxu0 %v1632
    %1662 = vmatprep.subr.mxu0 0.0
    %1663 = vmatpush1.msra.mxu0 %v1633
    %1664 = vmatprep.subr.mxu0 0.0
    %1665 = vmatpush1.msra.mxu0 %v1634
    %1666 = vmatprep.subr.mxu0 0.0
    %1667 = vmatpush1.msra.mxu0 %v1635
    %1668 = vmatprep.subr.mxu0 0.0
    %1669 = vmatpush1.msra.mxu0 %v1636
    %1670 = vmatprep.subr.mxu0 0.0
    %1671 = vmatpush1.msra.mxu0 %v1637
    %1672 = vmatprep.subr.mxu0 0.0
    %1673 = vmatpush1.msra.mxu0 %v1638
    %1674 = vmatprep.subr.mxu0 0.0
    %1675 = vmatpush1.msra.mxu0 %v1639
    %1676 = vmatprep.subr.mxu0 0.0
    %1677 = vmatpush1.msra.mxu0 %v1640
    %1678 = vmatprep.subr.mxu0 0.0
    %1679 = vmatpush1.msra.mxu0 %v1641
    %1680 = vmatprep.subr.mxu0 0.0
    %1681 = vmatpush1.msra.mxu0 %v1642
    %1682 = vmatprep.subr.mxu0 0.0
    %1683 = vmatpush1.msra.mxu0 0.0
    %1684 = vmatprep.subr.mxu0 0.0
    %1685 = vmatpush1.msra.mxu0 0.0
    %1686 = vmatprep.subr.mxu0 0.0
    %1687 = vmatpush1.msra.mxu0 0.0
    %1688 = vmatprep.subr.mxu0 0.0
    %1689 = vmatpush1.msra.mxu0 0.0
    %1690 = vmatprep.subr.mxu0 0.0
    %1691 = vmatpush1.msra.mxu0 0.0
    %1692 = vmatprep.subr.mxu0 0.0
    %1693 = vmatpush1.msra.mxu0 0.0
    %1694 = vmatprep.subr.mxu0 0.0
    %1695 = vmatpush1.msra.mxu0 0.0
    %1696 = vmatprep.subr.mxu0 0.0
    %1697 = vmatpush1.msra.mxu0 0.0
    %1698 = vmatprep.subr.mxu0 0.0
    %1699 = vmatpush1.msra.mxu0 0.0
    %1700 = vmatprep.subr.mxu0 0.0
    %1701 = vmatpush1.msra.mxu0 0.0
    %1702 = vmatprep.subr.mxu0 0.0
    %1703 = vmatpush1.msra.mxu0 0.0
    %1704 = vmatprep.subr.mxu0 0.0
    %1705 = vmatpush1.msra.mxu0 0.0
    %1706 = vmatprep.subr.mxu0 0.0
    %1707 = vmatpush1.msra.mxu0 0.0
    %1708 = vmatprep.subr.mxu0 0.0
    %1709 = vmatpush1.msra.mxu0 0.0
    %1710 = vmatprep.subr.mxu0 0.0
    %1711 = vmatpush1.msra.mxu0 0.0
    %1712 = vmatprep.subr.mxu0 0.0
    %1713 = vmatpush1.msra.mxu0 0.0
    %1714 = vmatprep.mubr.f32.mxu0 0.0
    %1715 = vmatmul.mubr.f32.gmra.mrb[0].mxu0 %v1626
    %v1716 = vpop.f32.mrb[0].mxu0
    %v1717 = vadd.f32 %v1648, %v1716
    %v1718 = vpop.f32.mrb[0].mxu0
    %1719 = vdwg.mxu0
    %vm1720 = vcmask 7168
    %1721 = vst.msk [vmem:[%s6] sm:$0xff] %vm1720, %v1717
    // Predicated region
    $region30: #{tpu_custom_call.1} parent=1 // pred_check
      _
    $region31: #{tpu_custom_call.1} parent=1 // pred_check_branch
      %1723 = sbr.rel (0) target = $region33
    $region32: #{tpu_custom_call.1} parent=1 // pred_region
      _
    $region33: #{tpu_custom_call.1} parent=1 // pred_fallthru
      _
    // Predicated region
    $region34: #{tpu_custom_call.1} parent=1 // pred_check
      _
    $region35: #{tpu_custom_call.1} parent=1 // pred_check_branch
      %1725 = sbr.rel (0) target = $region37
    $region36: #{tpu_custom_call.1} parent=1 // pred_region
      _
    $region37: #{tpu_custom_call.1} parent=1 // pred_fallthru
      _
    %1726 = vsyncpa [#allocation5], 1

</llo_original>
